<compile_context>
chip_gen: v7x
topology: tpu7x:2x2x1
jax: 0.10.0
libtpu: 0.0.40
codegen_flags: <defaults>
</compile_context>

<pallas_src>
import jax
import jax.numpy as jnp
from jax.experimental import pallas as pl
from jax.experimental.pallas import tpu as pltpu


def _round_up(n, m):
    return ((n + m - 1) // m) * m


def _pad_to(a, shape):
    pads = [(0, s - d) for d, s in zip(a.shape, shape)]
    if all(p == (0, 0) for p in pads):
        return a
    return jnp.pad(a, pads)


def mlp_kernel(x_ref, w1_ref, b1_ref, w2_ref, b2_ref, w3_ref, b3_ref, o_ref):
    # x arrives f32 straight from HBM (no wrapper pad/cast pass); cast to bf16
    # on-chip for the MXU.  Accumulate in f32; bias + ReLU epilogue in f32.
    x = x_ref[...].astype(jnp.bfloat16)

    # Layer 1
    h1 = jnp.dot(x, w1_ref[...], preferred_element_type=jnp.float32) + b1_ref[...]
    h1 = jnp.maximum(h1, 0.0).astype(jnp.bfloat16)

    # Layer 2
    h2 = jnp.dot(h1, w2_ref[...], preferred_element_type=jnp.float32) + b2_ref[...]
    h2 = jnp.maximum(h2, 0.0).astype(jnp.bfloat16)

    # Layer 3 (no activation) -- lane-dense 128-wide store.
    out = jnp.dot(h2, w3_ref[...], preferred_element_type=jnp.float32) + b3_ref[...]
    o_ref[...] = out.astype(o_ref.dtype)


def init_params(key, input_size, n_hidden, output_size):
    """Deterministic init matching nn.Linear shapes (weights stored (in, out))."""
    ks = jax.random.split(key, 6)

    def linear(kw, kb, fan_in, fan_out):
        bound = 1.0 / jnp.sqrt(fan_in)
        w = jax.random.uniform(kw, (fan_in, fan_out), jnp.float32, -bound, bound)
        b = jax.random.uniform(kb, (1, fan_out), jnp.float32, -bound, bound)
        return w, b

    w1, b1 = linear(ks[0], ks[1], input_size, n_hidden)
    w2, b2 = linear(ks[2], ks[3], n_hidden, n_hidden)
    w3, b3 = linear(ks[4], ks[5], n_hidden, output_size)
    return (w1, b1, w2, b2, w3, b3)


def prepare_params(params):
    """One-time pad + cast of the weights (call at init, NOT per forward).

    Hidden/output dims are padded to multiples of 128 lanes; zero padding is
    mathematically inert (zero bias -> ReLU(0)=0 -> zero weight rows).
    Weights go to bf16 (MXU dtype); biases stay f32 as (1, n) rows.
    """
    w1, b1, w2, b2, w3, b3 = params
    D, H = w1.shape
    O = w3.shape[1]
    Hp = _round_up(H, 128)   # 32  -> 128
    Op = _round_up(O, 128)   # 10  -> 128
    return {
        "w1": _pad_to(w1, (D, Hp)).astype(jnp.bfloat16),
        "b1": _pad_to(b1.reshape(1, -1), (1, Hp)).astype(jnp.float32),
        "w2": _pad_to(w2, (Hp, Hp)).astype(jnp.bfloat16),
        "b2": _pad_to(b2.reshape(1, -1), (1, Hp)).astype(jnp.float32),
        "w3": _pad_to(w3, (Hp, Op)).astype(jnp.bfloat16),
        "b3": _pad_to(b3.reshape(1, -1), (1, Op)).astype(jnp.float32),
        "dims": (D, H, O),
    }


def mlp_forward(x, prepped, *, tb=None, out_dtype=jnp.float32):
    """x: any shape that flattens to (-1, 784). Returns (B, output_size)."""
    w1, b1, w2, b2, w3, b3 = (prepped[k] for k in ("w1", "b1", "w2", "b2", "w3", "b3"))
    D, H, O = prepped["dims"]
    Hp = w1.shape[1]
    Op = w3.shape[1]

    x2d = x.reshape(-1, D)                 # == torch x.view(-1, 28*28)
    B = x2d.shape[0]

    # Batch tile: multiple of 128 (min multiple of 16), never larger than the
    # padded batch.  Default 128 keeps >=2 parallel steps for batch>=256 (v7x
    # dual TensorCore); pass a larger tb on single-TC v5e/v6e for one big step.
    Bp16 = _round_up(B, 16)
    if tb is None:
        tb = 128
    if Bp16 <= 128:
        tb = Bp16
    else:
        tb = _round_up(min(tb, Bp16), 128)
    Bp = _round_up(B, tb)

    x_p = _pad_to(x2d, (Bp, D))            # no-op when B is tile-aligned

    grid = (Bp // tb,)

    flops = 2 * Bp * (D * Hp + Hp * Hp + Hp * Op)
    bytes_accessed = (
        Bp * D * 4                                      # x (f32 in HBM)
        + (w1.size + w2.size + w3.size) * 2             # bf16 weights
        + (b1.size + b2.size + b3.size) * 4             # f32 biases
        + Bp * Op * jnp.dtype(out_dtype).itemsize       # output writeback
    )

    out = pl.pallas_call(
        mlp_kernel,
        out_shape=jax.ShapeDtypeStruct((Bp, Op), out_dtype),
        grid_spec=pltpu.PrefetchScalarGridSpec(
            num_scalar_prefetch=0,
            grid=grid,
            in_specs=[
                pl.BlockSpec((tb, D), lambda i: (i, 0)),    # x tile (f32, D=784 full dim)
                # Constant-index weight/bias blocks: Pallas keeps them resident
                # (same block index every step -> fetched once, no re-DMA).
                pl.BlockSpec((D, Hp), lambda i: (0, 0)),    # w1
                pl.BlockSpec((1, Hp), lambda i: (0, 0)),    # b1
                pl.BlockSpec((Hp, Hp), lambda i: (0, 0)),   # w2
                pl.BlockSpec((1, Hp), lambda i: (0, 0)),    # b2
                pl.BlockSpec((Hp, Op), lambda i: (0, 0)),   # w3
                pl.BlockSpec((1, Op), lambda i: (0, 0)),    # b3
            ],
            out_specs=pl.BlockSpec((tb, Op), lambda i: (i, 0)),
        ),
        compiler_params=pltpu.CompilerParams(
            dimension_semantics=("parallel",),
        ),
        cost_estimate=pl.CostEstimate(
            flops=flops, transcendentals=0, bytes_accessed=bytes_accessed),
    )(x_p, w1, b1, w2, b2, w3, b3)

    # Strip batch / output padding.
    return out[:B, :O]


if __name__ == "__main__":
    input_size = 28 * 28
    n_hidden = 32
    output_size = 10
    batch = 256          # tb=128 -> 2 parallel grid steps (both v7x TensorCores)

    key = jax.random.PRNGKey(0)
    kx, kp = jax.random.split(key)

    # MNIST-style input (B, 1, 28, 28); forward flattens to (B, 784).
    x = jax.random.normal(kx, (batch, 1, 28, 28), jnp.float32)
    params = init_params(kp, input_size, n_hidden, output_size)

    # One-time weight pad/cast (NOT repeated per forward call).
    prepped = prepare_params(params)

    out = mlp_forward(x, prepped, tb=128)
    out = jax.block_until_ready(out)
    assert out.shape == (batch, output_size)

    # Reference 1: same bf16-operand / f32-accumulation recipe as the kernel.
    w1, b1, w2, b2, w3, b3 = params
    xb = x.reshape(-1, input_size).astype(jnp.bfloat16)
    r = jnp.maximum(
        jnp.dot(xb, w1.astype(jnp.bfloat16), preferred_element_type=jnp.float32) + b1, 0.0
    ).astype(jnp.bfloat16)
    r = jnp.maximum(
        jnp.dot(r, w2.astype(jnp.bfloat16), preferred_element_type=jnp.float32) + b2, 0.0
    ).astype(jnp.bfloat16)
    ref = jnp.dot(r, w3.astype(jnp.bfloat16), preferred_element_type=jnp.float32) + b3
    assert jnp.allclose(out, ref, atol=1e-2, rtol=1e-2), float(jnp.max(jnp.abs(out - ref)))

    # Reference 2: full-f32 PyTorch semantics, looser tolerance (bf16 operands
    # are an intentional precision choice for the MXU).
    x32 = x.reshape(-1, input_size)
    ref32 = jnp.maximum(x32 @ w1 + b1, 0.0)
    ref32 = jnp.maximum(ref32 @ w2 + b2, 0.0)
    ref32 = ref32 @ w3 + b3
    assert jnp.allclose(out, ref32, atol=5e-2, rtol=5e-2)

    print("KERNEL_OK")
</pallas_src>

<mosaic_0001>
module attributes {stable_mosaic.version = 11 : i64} {
  func.func @mlp_kernel(%arg0: i32, %arg1: memref<128x784xf32, #tpu.memory_space<vmem>>, %arg2: memref<784x128xbf16, #tpu.memory_space<vmem>>, %arg3: memref<1x128xf32, #tpu.memory_space<vmem>>, %arg4: memref<128x128xbf16, #tpu.memory_space<vmem>>, %arg5: memref<1x128xf32, #tpu.memory_space<vmem>>, %arg6: memref<128x128xbf16, #tpu.memory_space<vmem>>, %arg7: memref<1x128xf32, #tpu.memory_space<vmem>>, %arg8: memref<128x128xf32, #tpu.memory_space<vmem>>) attributes {dimension_semantics = [#tpu.dimension_semantics<parallel>], iteration_bounds = array<i64: 2>, scalar_prefetch = 0 : i64, scratch_operands = 0 : i64, tpu.core_type = #tpu.core_type<tc>, window_params = [{transform_indices = @transform_0, window_bounds = array<i64: 128, 784>}, {pipeline_mode = #tpu.pipeline_mode<synchronous>, transform_indices = @transform_1, window_bounds = array<i64: 784, 128>}, {pipeline_mode = #tpu.pipeline_mode<synchronous>, transform_indices = @transform_2, window_bounds = array<i64: 1, 128>}, {pipeline_mode = #tpu.pipeline_mode<synchronous>, transform_indices = @transform_3, window_bounds = array<i64: 128, 128>}, {pipeline_mode = #tpu.pipeline_mode<synchronous>, transform_indices = @transform_4, window_bounds = array<i64: 1, 128>}, {pipeline_mode = #tpu.pipeline_mode<synchronous>, transform_indices = @transform_5, window_bounds = array<i64: 128, 128>}, {pipeline_mode = #tpu.pipeline_mode<synchronous>, transform_indices = @transform_6, window_bounds = array<i64: 1, 128>}, {transform_indices = @transform_7, window_bounds = array<i64: 128, 128>}]} {
    %c0 = arith.constant 0 : index
    %c0_0 = arith.constant 0 : index
    %0 = vector.load %arg1[%c0, %c0_0] : memref<128x784xf32, #tpu.memory_space<vmem>>, vector<128x784xf32>
    %1 = arith.truncf %0 : vector<128x784xf32> to vector<128x784xbf16>
    %c0_1 = arith.constant 0 : index
    %c0_2 = arith.constant 0 : index
    %2 = vector.load %arg2[%c0_1, %c0_2] : memref<784x128xbf16, #tpu.memory_space<vmem>>, vector<784x128xbf16>
    %cst = arith.constant dense<0.000000e+00> : vector<128x128xf32>
    %3 = tpu.matmul %1, %2, %cst {dimension_numbers = #tpu.dot_dimension_numbers<[1], [0], [0], [1], [0, 0, 1, 1], [], []>} : vector<128x784xbf16>, vector<784x128xbf16>, vector<128x128xf32> -> vector<128x128xf32>
    %c0_3 = arith.constant 0 : index
    %c0_4 = arith.constant 0 : index
    %4 = vector.load %arg3[%c0_3, %c0_4] : memref<1x128xf32, #tpu.memory_space<vmem>>, vector<1x128xf32>
    %5 = vector.broadcast %4 : vector<1x128xf32> to vector<128x128xf32>
    %6 = arith.addf %3, %5 : vector<128x128xf32>
    %cst_5 = arith.constant 0.000000e+00 : f32
    %7 = vector.broadcast %cst_5 : f32 to vector<128x128xf32>
    %8 = arith.maximumf %6, %7 : vector<128x128xf32>
    %9 = arith.truncf %8 : vector<128x128xf32> to vector<128x128xbf16>
    %c0_6 = arith.constant 0 : index
    %c0_7 = arith.constant 0 : index
    %10 = vector.load %arg4[%c0_6, %c0_7] : memref<128x128xbf16, #tpu.memory_space<vmem>>, vector<128x128xbf16>
    %cst_8 = arith.constant dense<0.000000e+00> : vector<128x128xf32>
    %11 = tpu.matmul %9, %10, %cst_8 {dimension_numbers = #tpu.dot_dimension_numbers<[1], [0], [0], [1], [0, 0, 1, 1], [], []>} : vector<128x128xbf16>, vector<128x128xbf16>, vector<128x128xf32> -> vector<128x128xf32>
    %c0_9 = arith.constant 0 : index
    %c0_10 = arith.constant 0 : index
    %12 = vector.load %arg5[%c0_9, %c0_10] : memref<1x128xf32, #tpu.memory_space<vmem>>, vector<1x128xf32>
    %13 = vector.broadcast %12 : vector<1x128xf32> to vector<128x128xf32>
    %14 = arith.addf %11, %13 : vector<128x128xf32>
    %cst_11 = arith.constant 0.000000e+00 : f32
    %15 = vector.broadcast %cst_11 : f32 to vector<128x128xf32>
    %16 = arith.maximumf %14, %15 : vector<128x128xf32>
    %17 = arith.truncf %16 : vector<128x128xf32> to vector<128x128xbf16>
    %c0_12 = arith.constant 0 : index
    %c0_13 = arith.constant 0 : index
    %18 = vector.load %arg6[%c0_12, %c0_13] : memref<128x128xbf16, #tpu.memory_space<vmem>>, vector<128x128xbf16>
    %cst_14 = arith.constant dense<0.000000e+00> : vector<128x128xf32>
    %19 = tpu.matmul %17, %18, %cst_14 {dimension_numbers = #tpu.dot_dimension_numbers<[1], [0], [0], [1], [0, 0, 1, 1], [], []>} : vector<128x128xbf16>, vector<128x128xbf16>, vector<128x128xf32> -> vector<128x128xf32>
    %c0_15 = arith.constant 0 : index
    %c0_16 = arith.constant 0 : index
    %20 = vector.load %arg7[%c0_15, %c0_16] : memref<1x128xf32, #tpu.memory_space<vmem>>, vector<1x128xf32>
    %21 = vector.broadcast %20 : vector<1x128xf32> to vector<128x128xf32>
    %22 = arith.addf %19, %21 : vector<128x128xf32>
    %c0_17 = arith.constant 0 : index
    %c0_18 = arith.constant 0 : index
    %23 = vector.load %arg8[%c0_17, %c0_18] : memref<128x128xf32, #tpu.memory_space<vmem>>, vector<128x128xf32>
    tpu.vector_store %arg8[%c0_17, %c0_18], %22 {strides = array<i32>} : memref<128x128xf32, #tpu.memory_space<vmem>>, vector<128x128xf32>,
    return
  }
  func.func @transform_0(%arg0: i32) -> (i32, i32) {
    %c0_i32 = arith.constant 0 : i32
    %c0_i32_0 = arith.constant 0 : i32
    return %arg0, %c0_i32 : i32, i32
  }
  func.func @transform_1(%arg0: i32) -> (i32, i32) {
    %c0_i32 = arith.constant 0 : i32
    %c0_i32_0 = arith.constant 0 : i32
    %c0_i32_1 = arith.constant 0 : i32
    return %c0_i32, %c0_i32_0 : i32, i32
  }
  func.func @transform_2(%arg0: i32) -> (i32, i32) {
    %c0_i32 = arith.constant 0 : i32
    %c0_i32_0 = arith.constant 0 : i32
    %c0_i32_1 = arith.constant 0 : i32
    return %c0_i32, %c0_i32_0 : i32, i32
  }
  func.func @transform_3(%arg0: i32) -> (i32, i32) {
    %c0_i32 = arith.constant 0 : i32
    %c0_i32_0 = arith.constant 0 : i32
    %c0_i32_1 = arith.constant 0 : i32
    return %c0_i32, %c0_i32_0 : i32, i32
  }
  func.func @transform_4(%arg0: i32) -> (i32, i32) {
    %c0_i32 = arith.constant 0 : i32
    %c0_i32_0 = arith.constant 0 : i32
    %c0_i32_1 = arith.constant 0 : i32
    return %c0_i32, %c0_i32_0 : i32, i32
  }
  func.func @transform_5(%arg0: i32) -> (i32, i32) {
    %c0_i32 = arith.constant 0 : i32
    %c0_i32_0 = arith.constant 0 : i32
    %c0_i32_1 = arith.constant 0 : i32
    return %c0_i32, %c0_i32_0 : i32, i32
  }
  func.func @transform_6(%arg0: i32) -> (i32, i32) {
    %c0_i32 = arith.constant 0 : i32
    %c0_i32_0 = arith.constant 0 : i32
    %c0_i32_1 = arith.constant 0 : i32
    return %c0_i32, %c0_i32_0 : i32, i32
  }
  func.func @transform_7(%arg0: i32) -> (i32, i32) {
    %c0_i32 = arith.constant 0 : i32
    %c0_i32_0 = arith.constant 0 : i32
    return %arg0, %c0_i32 : i32, i32
  }
}

</mosaic_0001>

<llo_original>
// kernel: tpu_custom_call.1
$region0: #{tpu_custom_call.1}
  #allocation0 [shape = 'u32[]', space=smem, size = 0x4, offset = 0x4, fixed_abs, tag = 'smem constant byte address 0x4 - core index']
  #allocation1 [shape = 'u32[144,128]{1,0:T(1,128)}', space=vmem, size = 0x12000, scoped, tag = 'internal scratch']
  %s0 = inlined_call_operand.vmem [shape: f32[256,784], index: 0, kind: input, shape index: {}]
  %s1 = inlined_call_operand.vmem [shape: bf16[784,128], index: 1, kind: input, shape index: {}]
  %s2 = inlined_call_operand.vmem [shape: f32[1,128], index: 2, kind: input, shape index: {}]
  %s3 = inlined_call_operand.vmem [shape: bf16[128,128], index: 3, kind: input, shape index: {}]
  %s4 = inlined_call_operand.vmem [shape: f32[1,128], index: 4, kind: input, shape index: {}]
  %s5 = inlined_call_operand.vmem [shape: bf16[128,128], index: 5, kind: input, shape index: {}]
  %s6 = inlined_call_operand.vmem [shape: f32[1,128], index: 6, kind: input, shape index: {}]
  %s7 = inlined_call_operand.hbm [shape: f32[256,128], index: 7, kind: output, shape index: {}]
  %s8 = sld [smem:[#allocation0]]
  $region61: #{tpu_custom_call.1} parent=0
    _
  %s10 = ssub.s32 1, %s8
  %s11 = scalar_select 0, %s10, %s8
  $region1: #{tpu_custom_call.1} parent=0
    #allocation2 [shape = 'u8[131072]{0}', space=vmem, size = 0x20000, scoped, tag = 'output window, operand 0']
    #allocation3 [shape = 's32[2]{0}', space=sflag, size = 0x8, scoped, tag = 'scoped memory for tpu_custom_call.1']
    %12 = vsyncpa [#allocation3], 0
    %s13 = scalar_lea.sflag [#allocation3], 1
    %14 = vsyncpa %s13, 0
    loop: start=0, step=1, limit=4
    $region2: #{tpu_custom_call.1} parent=1 // loop_pre_header
      _
    $region3: #{tpu_custom_call.1} parent=1 // loop_header
      %s16 = sphi 0, %s20
      %p17 = scmp.ge.s32.totalorder %s16, 4
      %s26 = sphi 0, %s28
      %s29 = sphi 0, %s26
      %s30 = sphi 0, %s29
      %s46 = sphi 0, %s30
      %s50 = sphi 0, %s50
      %s52 = sphi 0, %s50
      %s53 = sphi 0, %s52
      %s67 = sphi 0, %s53
      %s71 = sphi 0, %s71
      %s73 = sphi 0, %s71
      %s74 = sphi 0, %s73
      %s88 = sphi 0, %s74
      %s92 = sphi 0, %s92
      %s94 = sphi 0, %s92
      %s95 = sphi 0, %s94
      %s109 = sphi 0, %s95
      %s113 = sphi 0, %s113
      %s115 = sphi 0, %s113
      %s116 = sphi 0, %s115
      %s130 = sphi 0, %s116
      %s134 = sphi 0, %s134
      %s136 = sphi 0, %s134
      %s137 = sphi 0, %s136
      %s151 = sphi 0, %s137
      %s155 = sphi 0, %s155
      %s157 = sphi 0, %s155
      %s158 = sphi 0, %s157
      %s172 = sphi 0, %s158
      %s178 = sphi 0, %s180
      %s181 = sphi 0, %s178
      %s182 = sphi 0, %s181
      %s198 = sphi 0, %s182
    $region4: #{tpu_custom_call.1} parent=1 // loop_header_branch
      %19 = sbr.rel (%p17) target = $region8
    $region5: #{tpu_custom_call.1} parent=1 // loop_body
      %s21 = ssub.s32 %s16, 1
      %s22 = ssub.s32 %s16, 2
      %s23 = sadd.s32 %s16, 1
      %s24 = ssub.s32 %s16, %s23
      %p25 = scmp.eq.s32.totalorder %s24, 0
      %s27 = sadd.s32 %s26, 1
      %s28 = scalar_select %p25, %s26, %s27
      %p31 = pneg %p25
      %p32 = scmp.eq.s32.totalorder %s16, 1
      %p33 = por %p31, %p32
      %p34 = scmp.ne.s32.totalorder %s26, %s29
      %p35 = scmp.eq.s32.totalorder %s16, 0
      %p36 = por %p34, %p35
      %p37 = scmp.ne.s32.totalorder %s26, %s29
      %p38 = scmp.eq.s32.totalorder %s21, 1
      %p39 = por %p37, %p38
      %p40 = scmp.ne.s32.totalorder %s29, %s30
      %p41 = scmp.eq.s32.totalorder %s21, 0
      %p42 = por %p40, %p41
      %p43 = scmp.ne.s32.totalorder %s29, %s30
      %p44 = scmp.eq.s32.totalorder %s22, 1
      %p45 = por %p43, %p44
      %p47 = scmp.ne.s32.totalorder %s30, %s46
      %p48 = scmp.eq.s32.totalorder %s22, 0
      %p49 = por %p47, %p48
      %s51 = sadd.s32 %s50, 1
      %p54 = scmp.eq.s32.totalorder %s16, 1
      %p55 = scmp.ne.s32.totalorder %s50, %s52
      %p56 = scmp.eq.s32.totalorder %s16, 0
      %p57 = por %p55, %p56
      %p58 = scmp.ne.s32.totalorder %s50, %s52
      %p59 = scmp.eq.s32.totalorder %s21, 1
      %p60 = por %p58, %p59
      %p61 = scmp.ne.s32.totalorder %s52, %s53
      %p62 = scmp.eq.s32.totalorder %s21, 0
      %p63 = por %p61, %p62
      %p64 = scmp.ne.s32.totalorder %s52, %s53
      %p65 = scmp.eq.s32.totalorder %s22, 1
      %p66 = por %p64, %p65
      %p68 = scmp.ne.s32.totalorder %s53, %s67
      %p69 = scmp.eq.s32.totalorder %s22, 0
      %p70 = por %p68, %p69
      %s72 = sadd.s32 %s71, 1
      %p75 = scmp.eq.s32.totalorder %s16, 1
      %p76 = scmp.ne.s32.totalorder %s71, %s73
      %p77 = scmp.eq.s32.totalorder %s16, 0
      %p78 = por %p76, %p77
      %p79 = scmp.ne.s32.totalorder %s71, %s73
      %p80 = scmp.eq.s32.totalorder %s21, 1
      %p81 = por %p79, %p80
      %p82 = scmp.ne.s32.totalorder %s73, %s74
      %p83 = scmp.eq.s32.totalorder %s21, 0
      %p84 = por %p82, %p83
      %p85 = scmp.ne.s32.totalorder %s73, %s74
      %p86 = scmp.eq.s32.totalorder %s22, 1
      %p87 = por %p85, %p86
      %p89 = scmp.ne.s32.totalorder %s74, %s88
      %p90 = scmp.eq.s32.totalorder %s22, 0
      %p91 = por %p89, %p90
      %s93 = sadd.s32 %s92, 1
      %p96 = scmp.eq.s32.totalorder %s16, 1
      %p97 = scmp.ne.s32.totalorder %s92, %s94
      %p98 = scmp.eq.s32.totalorder %s16, 0
      %p99 = por %p97, %p98
      %p100 = scmp.ne.s32.totalorder %s92, %s94
      %p101 = scmp.eq.s32.totalorder %s21, 1
      %p102 = por %p100, %p101
      %p103 = scmp.ne.s32.totalorder %s94, %s95
      %p104 = scmp.eq.s32.totalorder %s21, 0
      %p105 = por %p103, %p104
      %p106 = scmp.ne.s32.totalorder %s94, %s95
      %p107 = scmp.eq.s32.totalorder %s22, 1
      %p108 = por %p106, %p107
      %p110 = scmp.ne.s32.totalorder %s95, %s109
      %p111 = scmp.eq.s32.totalorder %s22, 0
      %p112 = por %p110, %p111
      %s114 = sadd.s32 %s113, 1
      %p117 = scmp.eq.s32.totalorder %s16, 1
      %p118 = scmp.ne.s32.totalorder %s113, %s115
      %p119 = scmp.eq.s32.totalorder %s16, 0
      %p120 = por %p118, %p119
      %p121 = scmp.ne.s32.totalorder %s113, %s115
      %p122 = scmp.eq.s32.totalorder %s21, 1
      %p123 = por %p121, %p122
      %p124 = scmp.ne.s32.totalorder %s115, %s116
      %p125 = scmp.eq.s32.totalorder %s21, 0
      %p126 = por %p124, %p125
      %p127 = scmp.ne.s32.totalorder %s115, %s116
      %p128 = scmp.eq.s32.totalorder %s22, 1
      %p129 = por %p127, %p128
      %p131 = scmp.ne.s32.totalorder %s116, %s130
      %p132 = scmp.eq.s32.totalorder %s22, 0
      %p133 = por %p131, %p132
      %s135 = sadd.s32 %s134, 1
      %p138 = scmp.eq.s32.totalorder %s16, 1
      %p139 = scmp.ne.s32.totalorder %s134, %s136
      %p140 = scmp.eq.s32.totalorder %s16, 0
      %p141 = por %p139, %p140
      %p142 = scmp.ne.s32.totalorder %s134, %s136
      %p143 = scmp.eq.s32.totalorder %s21, 1
      %p144 = por %p142, %p143
      %p145 = scmp.ne.s32.totalorder %s136, %s137
      %p146 = scmp.eq.s32.totalorder %s21, 0
      %p147 = por %p145, %p146
      %p148 = scmp.ne.s32.totalorder %s136, %s137
      %p149 = scmp.eq.s32.totalorder %s22, 1
      %p150 = por %p148, %p149
      %p152 = scmp.ne.s32.totalorder %s137, %s151
      %p153 = scmp.eq.s32.totalorder %s22, 0
      %p154 = por %p152, %p153
      %s156 = sadd.s32 %s155, 1
      %p159 = scmp.eq.s32.totalorder %s16, 1
      %p160 = scmp.ne.s32.totalorder %s155, %s157
      %p161 = scmp.eq.s32.totalorder %s16, 0
      %p162 = por %p160, %p161
      %p163 = scmp.ne.s32.totalorder %s155, %s157
      %p164 = scmp.eq.s32.totalorder %s21, 1
      %p165 = por %p163, %p164
      %p166 = scmp.ne.s32.totalorder %s157, %s158
      %p167 = scmp.eq.s32.totalorder %s21, 0
      %p168 = por %p166, %p167
      %p169 = scmp.ne.s32.totalorder %s157, %s158
      %p170 = scmp.eq.s32.totalorder %s22, 1
      %p171 = por %p169, %p170
      %p173 = scmp.ne.s32.totalorder %s158, %s172
      %p174 = scmp.eq.s32.totalorder %s22, 0
      %p175 = por %p173, %p174
      %s176 = ssub.s32 %s16, %s23
      %p177 = scmp.eq.s32.totalorder %s176, 0
      %s179 = sadd.s32 %s178, 1
      %s180 = scalar_select %p177, %s178, %s179
      %p183 = pneg %p177
      %p184 = scmp.eq.s32.totalorder %s16, 1
      %p185 = por %p183, %p184
      %p186 = scmp.ne.s32.totalorder %s178, %s181
      %p187 = scmp.eq.s32.totalorder %s16, 0
      %p188 = por %p186, %p187
      %p189 = scmp.ne.s32.totalorder %s178, %s181
      %p190 = scmp.eq.s32.totalorder %s21, 1
      %p191 = por %p189, %p190
      %p192 = scmp.ne.s32.totalorder %s181, %s182
      %p193 = scmp.eq.s32.totalorder %s21, 0
      %p194 = por %p192, %p193
      %p195 = scmp.ne.s32.totalorder %s181, %s182
      %p196 = scmp.eq.s32.totalorder %s22, 1
      %p197 = por %p195, %p196
      %p199 = scmp.ne.s32.totalorder %s182, %s198
      %p200 = scmp.eq.s32.totalorder %s22, 0
      %p201 = por %p199, %p200
      %p202 = scmp.le.s32.totalorder 1, %s16
      %p203 = scmp.lt.s32.totalorder %s16, 3
      %p204 = pnand %p202, %p203
      %p205 = pneg %p204
      // Predicated region
      $region9: #{tpu_custom_call.1} parent=5 // pred_check
        _
      $region10: #{tpu_custom_call.1} parent=5 // pred_check_branch
        %207 = sbr.rel (%p204) target = $region12
      $region11: #{tpu_custom_call.1} parent=5 // pred_region
        %s208 = ssub.s32 %s16, 1
        // Predicated region
        $region13: #{tpu_custom_call.1} parent=11 // pred_check
          %p209 = pneg %p63
        $region14: #{tpu_custom_call.1} parent=11 // pred_check_branch
          %211 = sbr.rel (%p209) target = $region16
        $region15: #{tpu_custom_call.1} parent=11 // pred_region
          _
        $region16: #{tpu_custom_call.1} parent=11 // pred_fallthru
          _
        // Predicated region
        $region17: #{tpu_custom_call.1} parent=11 // pred_check
          %p212 = pneg %p84
        $region18: #{tpu_custom_call.1} parent=11 // pred_check_branch
          %214 = sbr.rel (%p212) target = $region20
        $region19: #{tpu_custom_call.1} parent=11 // pred_region
          _
        $region20: #{tpu_custom_call.1} parent=11 // pred_fallthru
          _
        // Predicated region
        $region21: #{tpu_custom_call.1} parent=11 // pred_check
          %p215 = pneg %p105
        $region22: #{tpu_custom_call.1} parent=11 // pred_check_branch
          %217 = sbr.rel (%p215) target = $region24
        $region23: #{tpu_custom_call.1} parent=11 // pred_region
          _
        $region24: #{tpu_custom_call.1} parent=11 // pred_fallthru
          _
        // Predicated region
        $region25: #{tpu_custom_call.1} parent=11 // pred_check
          %p218 = pneg %p126
        $region26: #{tpu_custom_call.1} parent=11 // pred_check_branch
          %220 = sbr.rel (%p218) target = $region28
        $region27: #{tpu_custom_call.1} parent=11 // pred_region
          _
        $region28: #{tpu_custom_call.1} parent=11 // pred_fallthru
          _
        // Predicated region
        $region29: #{tpu_custom_call.1} parent=11 // pred_check
          %p221 = pneg %p147
        $region30: #{tpu_custom_call.1} parent=11 // pred_check_branch
          %223 = sbr.rel (%p221) target = $region32
        $region31: #{tpu_custom_call.1} parent=11 // pred_region
          _
        $region32: #{tpu_custom_call.1} parent=11 // pred_fallthru
          _
        // Predicated region
        $region33: #{tpu_custom_call.1} parent=11 // pred_check
          %p224 = pneg %p168
        $region34: #{tpu_custom_call.1} parent=11 // pred_check_branch
          %226 = sbr.rel (%p224) target = $region36
        $region35: #{tpu_custom_call.1} parent=11 // pred_region
          _
        $region36: #{tpu_custom_call.1} parent=11 // pred_fallthru
          _
      $region12: #{tpu_custom_call.1} parent=5 // pred_fallthru
        _
      %p227 = scmp.lt.s32.totalorder %s16, 2
      // Predicated region
      $region37: #{tpu_custom_call.1} parent=5 // pred_check
        %p228 = pneg %p227
      $region38: #{tpu_custom_call.1} parent=5 // pred_check_branch
        %230 = sbr.rel (%p228) target = $region40
      $region39: #{tpu_custom_call.1} parent=5 // pred_region
        // Predicated region
        $region41: #{tpu_custom_call.1} parent=39 // pred_check
          %p231 = pneg %p36
        $region42: #{tpu_custom_call.1} parent=39 // pred_check_branch
          %233 = sbr.rel (%p231) target = $region44
        $region43: #{tpu_custom_call.1} parent=39 // pred_region
          %s234 = smul.u32 16, %s16
          %p235 = scmp.lt.s32.totalorder %s234, 31
          %s236 = scalar_select %p235, %s234, 31
          %s237 = smul.addr %s236, 7
          %s238 = smul.addr %s237, 8
          %s239 = scalar_lea.vmem %s0, %s238
          %s240 = smul.u32 16, %s16
        $region44: #{tpu_custom_call.1} parent=39 // pred_fallthru
          _
      $region40: #{tpu_custom_call.1} parent=5 // pred_fallthru
        _
      %p241 = scmp.le.s32.totalorder 1, %s16
      %p242 = scmp.lt.s32.totalorder %s16, 3
      %p243 = pnand %p241, %p242
      %p244 = pneg %p243
      // Predicated region
      $region45: #{tpu_custom_call.1} parent=5 // pred_check
        _
      $region46: #{tpu_custom_call.1} parent=5 // pred_check_branch
        %246 = sbr.rel (%p243) target = $region48
      $region47: #{tpu_custom_call.1} parent=5 // pred_region
        %s247 = ssub.s32 %s16, 1
        %s248 = smul.u32 16, %s21
        %p249 = scmp.lt.s32.totalorder %s248, 31
        %s250 = scalar_select %p249, %s248, 31
        %s251 = smul.addr %s250, 7
        %s252 = smul.addr %s251, 8
        %s253 = scalar_lea.vmem %s0, %s252
        %p254 = pneg %p42
        %p255 = pneg %p39
        %p256 = pneg %p63
        %p257 = pneg %p60
        %p258 = pneg %p84
        %p259 = pneg %p81
        %p260 = pneg %p105
        %p261 = pneg %p102
        %p262 = pneg %p126
        %p263 = pneg %p123
        %p264 = pneg %p147
        %p265 = pneg %p144
        %p266 = pneg %p168
        %p267 = pneg %p165
        %p268 = pneg %p194
        %p269 = pneg %p191
        %s270 = sand.u32 %s181, 1
        %s271 = scalar_lea.sflag [#allocation3], %s270
        %s272 = sand.u32 %s181, 1
        %s273 = smul.addr %s272, 128
        %s274 = scalar_lea.vmem [#allocation2], %s273
        %s275 = smul.u32 16, %s21
        %p276 = scmp.lt.s32.totalorder %s275, 31
        %s277 = scalar_select %p276, %s275, 31
        %s278 = smul.addr %s277, 7
        %s279 = smul.addr %s278, 8
        %s280 = scalar_lea.vmem %s0, %s279
        %s281 = smul.u32 16, %s21
        %s282 = smul.u32 16, %s21
        %v284 = vld [vmem:[%s280] sm:$0xff]
        %v285 = vld [vmem:[%s280 + $0x8] sm:$0xff]
        %v286 = vld [vmem:[%s280 + $0x10] sm:$0xff]
        %v287 = vld [vmem:[%s280 + $0x18] sm:$0xff]
        %v288 = vld [vmem:[%s280 + $0x20] sm:$0xff]
        %v289 = vld [vmem:[%s280 + $0x28] sm:$0xff]
        %v290 = vld [vmem:[%s280 + $0x30] sm:$0xff]
        %v291 = vld [vmem:[%s280 + $0x38] sm:$0xff]
        %v292 = vld [vmem:[%s280 + $0x40] sm:$0xff]
        %v293 = vld [vmem:[%s280 + $0x48] sm:$0xff]
        %v294 = vld [vmem:[%s280 + $0x50] sm:$0xff]
        %v295 = vld [vmem:[%s280 + $0x58] sm:$0xff]
        %v296 = vld [vmem:[%s280 + $0x60] sm:$0xff]
        %v297 = vld [vmem:[%s280 + $0x68] sm:$0xff]
        %v298 = vld [vmem:[%s280 + $0x70] sm:$0xff]
        %v299 = vld [vmem:[%s280 + $0x78] sm:$0xff]
        %v300 = vld [vmem:[%s280 + $0x80] sm:$0xff]
        %v301 = vld [vmem:[%s280 + $0x88] sm:$0xff]
        %v302 = vld [vmem:[%s280 + $0x90] sm:$0xff]
        %v303 = vld [vmem:[%s280 + $0x98] sm:$0xff]
        %v304 = vld [vmem:[%s280 + $0xa0] sm:$0xff]
        %v305 = vld [vmem:[%s280 + $0xa8] sm:$0xff]
        %v306 = vld [vmem:[%s280 + $0xb0] sm:$0xff]
        %v307 = vld [vmem:[%s280 + $0xb8] sm:$0xff]
        %v308 = vld [vmem:[%s280 + $0xc0] sm:$0xff]
        %v309 = vld [vmem:[%s280 + $0xc8] sm:$0xff]
        %v310 = vld [vmem:[%s280 + $0xd0] sm:$0xff]
        %v311 = vld [vmem:[%s280 + $0xd8] sm:$0xff]
        %v312 = vld [vmem:[%s280 + $0xe0] sm:$0xff]
        %v313 = vld [vmem:[%s280 + $0xe8] sm:$0xff]
        %v314 = vld [vmem:[%s280 + $0xf0] sm:$0xff]
        %v315 = vld [vmem:[%s280 + $0xf8] sm:$0xff]
        %v316 = vld [vmem:[%s280 + $0x100] sm:$0xff]
        %v317 = vld [vmem:[%s280 + $0x108] sm:$0xff]
        %v318 = vld [vmem:[%s280 + $0x110] sm:$0xff]
        %v319 = vld [vmem:[%s280 + $0x118] sm:$0xff]
        %v320 = vld [vmem:[%s280 + $0x120] sm:$0xff]
        %v321 = vld [vmem:[%s280 + $0x128] sm:$0xff]
        %v322 = vld [vmem:[%s280 + $0x130] sm:$0xff]
        %v323 = vld [vmem:[%s280 + $0x138] sm:$0xff]
        %v324 = vld [vmem:[%s280 + $0x140] sm:$0xff]
        %v325 = vld [vmem:[%s280 + $0x148] sm:$0xff]
        %v326 = vld [vmem:[%s280 + $0x150] sm:$0xff]
        %v327 = vld [vmem:[%s280 + $0x158] sm:$0xff]
        %v328 = vld [vmem:[%s280 + $0x160] sm:$0xff]
        %v329 = vld [vmem:[%s280 + $0x168] sm:$0xff]
        %v330 = vld [vmem:[%s280 + $0x170] sm:$0xff]
        %v331 = vld [vmem:[%s280 + $0x178] sm:$0xff]
        %v332 = vld [vmem:[%s280 + $0x180] sm:$0xff]
        %v333 = vld [vmem:[%s280 + $0x188] sm:$0xff]
        %v334 = vld [vmem:[%s280 + $0x190] sm:$0xff]
        %v335 = vld [vmem:[%s280 + $0x198] sm:$0xff]
        %v336 = vld [vmem:[%s280 + $0x1a0] sm:$0xff]
        %v337 = vld [vmem:[%s280 + $0x1a8] sm:$0xff]
        %v338 = vld [vmem:[%s280 + $0x1b0] sm:$0xff]
        %v339 = vld [vmem:[%s280 + $0x1b8] sm:$0xff]
        %v340 = vld [vmem:[%s280 + $0x1c0] sm:$0xff]
        %v341 = vld [vmem:[%s280 + $0x1c8] sm:$0xff]
        %v342 = vld [vmem:[%s280 + $0x1d0] sm:$0xff]
        %v343 = vld [vmem:[%s280 + $0x1d8] sm:$0xff]
        %v344 = vld [vmem:[%s280 + $0x1e0] sm:$0xff]
        %v345 = vld [vmem:[%s280 + $0x1e8] sm:$0xff]
        %v346 = vld [vmem:[%s280 + $0x1f0] sm:$0xff]
        %v347 = vld [vmem:[%s280 + $0x1f8] sm:$0xff]
        %v348 = vld [vmem:[%s280 + $0x200] sm:$0xff]
        %v349 = vld [vmem:[%s280 + $0x208] sm:$0xff]
        %v350 = vld [vmem:[%s280 + $0x210] sm:$0xff]
        %v351 = vld [vmem:[%s280 + $0x218] sm:$0xff]
        %v352 = vld [vmem:[%s280 + $0x220] sm:$0xff]
        %v353 = vld [vmem:[%s280 + $0x228] sm:$0xff]
        %v354 = vld [vmem:[%s280 + $0x230] sm:$0xff]
        %v355 = vld [vmem:[%s280 + $0x238] sm:$0xff]
        %v356 = vld [vmem:[%s280 + $0x240] sm:$0xff]
        %v357 = vld [vmem:[%s280 + $0x248] sm:$0xff]
        %v358 = vld [vmem:[%s280 + $0x250] sm:$0xff]
        %v359 = vld [vmem:[%s280 + $0x258] sm:$0xff]
        %v360 = vld [vmem:[%s280 + $0x260] sm:$0xff]
        %v361 = vld [vmem:[%s280 + $0x268] sm:$0xff]
        %v362 = vld [vmem:[%s280 + $0x270] sm:$0xff]
        %v363 = vld [vmem:[%s280 + $0x278] sm:$0xff]
        %v364 = vld [vmem:[%s280 + $0x280] sm:$0xff]
        %v365 = vld [vmem:[%s280 + $0x288] sm:$0xff]
        %v366 = vld [vmem:[%s280 + $0x290] sm:$0xff]
        %v367 = vld [vmem:[%s280 + $0x298] sm:$0xff]
        %v368 = vld [vmem:[%s280 + $0x2a0] sm:$0xff]
        %v369 = vld [vmem:[%s280 + $0x2a8] sm:$0xff]
        %v370 = vld [vmem:[%s280 + $0x2b0] sm:$0xff]
        %v371 = vld [vmem:[%s280 + $0x2b8] sm:$0xff]
        %v372 = vld [vmem:[%s280 + $0x2c0] sm:$0xff]
        %v373 = vld [vmem:[%s280 + $0x2c8] sm:$0xff]
        %v374 = vld [vmem:[%s280 + $0x2d0] sm:$0xff]
        %v375 = vld [vmem:[%s280 + $0x2d8] sm:$0xff]
        %v376 = vld [vmem:[%s280 + $0x2e0] sm:$0xff]
        %v377 = vld [vmem:[%s280 + $0x2e8] sm:$0xff]
        %v378 = vld [vmem:[%s280 + $0x2f0] sm:$0xff]
        %v379 = vld [vmem:[%s280 + $0x2f8] sm:$0xff]
        %v380 = vld [vmem:[%s280 + $0x300] sm:$0xff]
        %v381 = vld [vmem:[%s280 + $0x308] sm:$0xff]
        %v382 = vld [vmem:[%s280 + $0x310] sm:$0xff]
        %v383 = vld [vmem:[%s280 + $0x318] sm:$0xff]
        %v384 = vld [vmem:[%s280 + $0x320] sm:$0xff]
        %v385 = vld [vmem:[%s280 + $0x328] sm:$0xff]
        %v386 = vld [vmem:[%s280 + $0x330] sm:$0xff]
        %v387 = vld [vmem:[%s280 + $0x338] sm:$0xff]
        %v388 = vld [vmem:[%s280 + $0x340] sm:$0xff]
        %v389 = vld [vmem:[%s280 + $0x348] sm:$0xff]
        %v390 = vld [vmem:[%s280 + $0x350] sm:$0xff]
        %v391 = vld [vmem:[%s280 + $0x358] sm:$0xff]
        %v392 = vld [vmem:[%s280 + $0x360] sm:$0xff]
        %v393 = vld [vmem:[%s280 + $0x368] sm:$0xff]
        %v394 = vld [vmem:[%s280 + $0x370] sm:$0xff]
        %v395 = vld [vmem:[%s280 + $0x378] sm:$0xff]
        %v396 = vpack.c.bf16 %v291, %v284
        %v397 = vpack.c.bf16 %v292, %v285
        %v398 = vpack.c.bf16 %v293, %v286
        %v399 = vpack.c.bf16 %v294, %v287
        %v400 = vpack.c.bf16 %v295, %v288
        %v401 = vpack.c.bf16 %v296, %v289
        %v402 = vpack.c.bf16 %v297, %v290
        %v403 = vpack.c.bf16 %v305, %v298
        %v404 = vpack.c.bf16 %v306, %v299
        %v405 = vpack.c.bf16 %v307, %v300
        %v406 = vpack.c.bf16 %v308, %v301
        %v407 = vpack.c.bf16 %v309, %v302
        %v408 = vpack.c.bf16 %v310, %v303
        %v409 = vpack.c.bf16 %v311, %v304
        %v410 = vpack.c.bf16 %v319, %v312
        %v411 = vpack.c.bf16 %v320, %v313
        %v412 = vpack.c.bf16 %v321, %v314
        %v413 = vpack.c.bf16 %v322, %v315
        %v414 = vpack.c.bf16 %v323, %v316
        %v415 = vpack.c.bf16 %v324, %v317
        %v416 = vpack.c.bf16 %v325, %v318
        %v417 = vpack.c.bf16 %v333, %v326
        %v418 = vpack.c.bf16 %v334, %v327
        %v419 = vpack.c.bf16 %v335, %v328
        %v420 = vpack.c.bf16 %v336, %v329
        %v421 = vpack.c.bf16 %v337, %v330
        %v422 = vpack.c.bf16 %v338, %v331
        %v423 = vpack.c.bf16 %v339, %v332
        %v424 = vpack.c.bf16 %v347, %v340
        %v425 = vpack.c.bf16 %v348, %v341
        %v426 = vpack.c.bf16 %v349, %v342
        %v427 = vpack.c.bf16 %v350, %v343
        %v428 = vpack.c.bf16 %v351, %v344
        %v429 = vpack.c.bf16 %v352, %v345
        %v430 = vpack.c.bf16 %v353, %v346
        %v431 = vpack.c.bf16 %v361, %v354
        %v432 = vpack.c.bf16 %v362, %v355
        %v433 = vpack.c.bf16 %v363, %v356
        %v434 = vpack.c.bf16 %v364, %v357
        %v435 = vpack.c.bf16 %v365, %v358
        %v436 = vpack.c.bf16 %v366, %v359
        %v437 = vpack.c.bf16 %v367, %v360
        %v438 = vpack.c.bf16 %v375, %v368
        %v439 = vpack.c.bf16 %v376, %v369
        %v440 = vpack.c.bf16 %v377, %v370
        %v441 = vpack.c.bf16 %v378, %v371
        %v442 = vpack.c.bf16 %v379, %v372
        %v443 = vpack.c.bf16 %v380, %v373
        %v444 = vpack.c.bf16 %v381, %v374
        %v445 = vpack.c.bf16 %v389, %v382
        %v446 = vpack.c.bf16 %v390, %v383
        %v447 = vpack.c.bf16 %v391, %v384
        %v448 = vpack.c.bf16 %v392, %v385
        %v449 = vpack.c.bf16 %v393, %v386
        %v450 = vpack.c.bf16 %v394, %v387
        %v451 = vpack.c.bf16 %v395, %v388
        %v452 = vld [vmem:[%s1] sm:$0xf]
        %v453 = vld [vmem:[%s1 + $0x4] sm:$0xf]
        %v454 = vld [vmem:[%s1 + $0x8] sm:$0xf]
        %v455 = vld [vmem:[%s1 + $0xc] sm:$0xf]
        %v456 = vld [vmem:[%s1 + $0x10] sm:$0xf]
        %v457 = vld [vmem:[%s1 + $0x14] sm:$0xf]
        %v458 = vld [vmem:[%s1 + $0x18] sm:$0xf]
        %v459 = vld [vmem:[%s1 + $0x1c] sm:$0xf]
        %v460 = vld [vmem:[%s1 + $0x20] sm:$0xf]
        %v461 = vld [vmem:[%s1 + $0x24] sm:$0xf]
        %v462 = vld [vmem:[%s1 + $0x28] sm:$0xf]
        %v463 = vld [vmem:[%s1 + $0x2c] sm:$0xf]
        %v464 = vld [vmem:[%s1 + $0x30] sm:$0xf]
        %v465 = vld [vmem:[%s1 + $0x34] sm:$0xf]
        %v466 = vld [vmem:[%s1 + $0x38] sm:$0xf]
        %v467 = vld [vmem:[%s1 + $0x3c] sm:$0xf]
        %v468 = vld [vmem:[%s1 + $0x40] sm:$0xf]
        %v469 = vld [vmem:[%s1 + $0x44] sm:$0xf]
        %v470 = vld [vmem:[%s1 + $0x48] sm:$0xf]
        %v471 = vld [vmem:[%s1 + $0x4c] sm:$0xf]
        %v472 = vld [vmem:[%s1 + $0x50] sm:$0xf]
        %v473 = vld [vmem:[%s1 + $0x54] sm:$0xf]
        %v474 = vld [vmem:[%s1 + $0x58] sm:$0xf]
        %v475 = vld [vmem:[%s1 + $0x5c] sm:$0xf]
        %v476 = vld [vmem:[%s1 + $0x60] sm:$0xf]
        %v477 = vld [vmem:[%s1 + $0x64] sm:$0xf]
        %v478 = vld [vmem:[%s1 + $0x68] sm:$0xf]
        %v479 = vld [vmem:[%s1 + $0x6c] sm:$0xf]
        %v480 = vld [vmem:[%s1 + $0x70] sm:$0xf]
        %v481 = vld [vmem:[%s1 + $0x74] sm:$0xf]
        %v482 = vld [vmem:[%s1 + $0x78] sm:$0xf]
        %v483 = vld [vmem:[%s1 + $0x7c] sm:$0xf]
        %v484 = vld [vmem:[%s1 + $0x80] sm:$0xf]
        %v485 = vld [vmem:[%s1 + $0x84] sm:$0xf]
        %v486 = vld [vmem:[%s1 + $0x88] sm:$0xf]
        %v487 = vld [vmem:[%s1 + $0x8c] sm:$0xf]
        %v488 = vld [vmem:[%s1 + $0x90] sm:$0xf]
        %v489 = vld [vmem:[%s1 + $0x94] sm:$0xf]
        %v490 = vld [vmem:[%s1 + $0x98] sm:$0xf]
        %v491 = vld [vmem:[%s1 + $0x9c] sm:$0xf]
        %v492 = vld [vmem:[%s1 + $0xa0] sm:$0xf]
        %v493 = vld [vmem:[%s1 + $0xa4] sm:$0xf]
        %v494 = vld [vmem:[%s1 + $0xa8] sm:$0xf]
        %v495 = vld [vmem:[%s1 + $0xac] sm:$0xf]
        %v496 = vld [vmem:[%s1 + $0xb0] sm:$0xf]
        %v497 = vld [vmem:[%s1 + $0xb4] sm:$0xf]
        %v498 = vld [vmem:[%s1 + $0xb8] sm:$0xf]
        %v499 = vld [vmem:[%s1 + $0xbc] sm:$0xf]
        %v500 = vld [vmem:[%s1 + $0xc0] sm:$0xf]
        %v501 = vld [vmem:[%s1 + $0xc4] sm:$0xf]
        %v502 = vld [vmem:[%s1 + $0xc8] sm:$0xf]
        %v503 = vld [vmem:[%s1 + $0xcc] sm:$0xf]
        %v504 = vld [vmem:[%s1 + $0xd0] sm:$0xf]
        %v505 = vld [vmem:[%s1 + $0xd4] sm:$0xf]
        %v506 = vld [vmem:[%s1 + $0xd8] sm:$0xf]
        %v507 = vld [vmem:[%s1 + $0xdc] sm:$0xf]
        %v508 = vld [vmem:[%s1 + $0xe0] sm:$0xf]
        %v509 = vld [vmem:[%s1 + $0xe4] sm:$0xf]
        %v510 = vld [vmem:[%s1 + $0xe8] sm:$0xf]
        %v511 = vld [vmem:[%s1 + $0xec] sm:$0xf]
        %v512 = vld [vmem:[%s1 + $0xf0] sm:$0xf]
        %v513 = vld [vmem:[%s1 + $0xf4] sm:$0xf]
        %v514 = vld [vmem:[%s1 + $0xf8] sm:$0xf]
        %v515 = vld [vmem:[%s1 + $0xfc] sm:$0xf]
        %v516 = vld [vmem:[%s1 + $0x100] sm:$0xf]
        %v517 = vld [vmem:[%s1 + $0x104] sm:$0xf]
        %v518 = vld [vmem:[%s1 + $0x108] sm:$0xf]
        %v519 = vld [vmem:[%s1 + $0x10c] sm:$0xf]
        %v520 = vld [vmem:[%s1 + $0x110] sm:$0xf]
        %v521 = vld [vmem:[%s1 + $0x114] sm:$0xf]
        %v522 = vld [vmem:[%s1 + $0x118] sm:$0xf]
        %v523 = vld [vmem:[%s1 + $0x11c] sm:$0xf]
        %v524 = vld [vmem:[%s1 + $0x120] sm:$0xf]
        %v525 = vld [vmem:[%s1 + $0x124] sm:$0xf]
        %v526 = vld [vmem:[%s1 + $0x128] sm:$0xf]
        %v527 = vld [vmem:[%s1 + $0x12c] sm:$0xf]
        %v528 = vld [vmem:[%s1 + $0x130] sm:$0xf]
        %v529 = vld [vmem:[%s1 + $0x134] sm:$0xf]
        %v530 = vld [vmem:[%s1 + $0x138] sm:$0xf]
        %v531 = vld [vmem:[%s1 + $0x13c] sm:$0xf]
        %v532 = vld [vmem:[%s1 + $0x140] sm:$0xf]
        %v533 = vld [vmem:[%s1 + $0x144] sm:$0xf]
        %v534 = vld [vmem:[%s1 + $0x148] sm:$0xf]
        %v535 = vld [vmem:[%s1 + $0x14c] sm:$0xf]
        %v536 = vld [vmem:[%s1 + $0x150] sm:$0xf]
        %v537 = vld [vmem:[%s1 + $0x154] sm:$0xf]
        %v538 = vld [vmem:[%s1 + $0x158] sm:$0xf]
        %v539 = vld [vmem:[%s1 + $0x15c] sm:$0xf]
        %v540 = vld [vmem:[%s1 + $0x160] sm:$0xf]
        %v541 = vld [vmem:[%s1 + $0x164] sm:$0xf]
        %v542 = vld [vmem:[%s1 + $0x168] sm:$0xf]
        %v543 = vld [vmem:[%s1 + $0x16c] sm:$0xf]
        %v544 = vld [vmem:[%s1 + $0x170] sm:$0xf]
        %v545 = vld [vmem:[%s1 + $0x174] sm:$0xf]
        %v546 = vld [vmem:[%s1 + $0x178] sm:$0xf]
        %v547 = vld [vmem:[%s1 + $0x17c] sm:$0xf]
        %v548 = vld [vmem:[%s1 + $0x180] sm:$0xf]
        %v549 = vld [vmem:[%s1 + $0x184] sm:$0xf]
        %v550 = vld [vmem:[%s2] sm:$0x1]
        %v552 = vlaneseq
        %v553 = vshrl.u32 %v552, 7
        %v554 = vsub.s32 0, %v553
        %v555 = vrot.slane %v550, %v554
        %v655 = vunpack.c.l.b16 %v452
        %v656 = vunpack.c.l.b16 %v453
        %v657 = vunpack.c.l.b16 %v454
        %v658 = vunpack.c.l.b16 %v455
        %v659 = vunpack.c.l.b16 %v456
        %v660 = vunpack.c.l.b16 %v457
        %v661 = vunpack.c.l.b16 %v458
        %v662 = vunpack.c.l.b16 %v459
        %v663 = vunpack.c.l.b16 %v460
        %v664 = vunpack.c.l.b16 %v461
        %v665 = vunpack.c.l.b16 %v462
        %v666 = vunpack.c.l.b16 %v463
        %v667 = vunpack.c.l.b16 %v464
        %v668 = vunpack.c.l.b16 %v465
        %v669 = vunpack.c.l.b16 %v466
        %v670 = vunpack.c.l.b16 %v467
        %v671 = vunpack.c.l.b16 %v468
        %v672 = vunpack.c.l.b16 %v469
        %v673 = vunpack.c.l.b16 %v470
        %v674 = vunpack.c.l.b16 %v471
        %v675 = vunpack.c.l.b16 %v472
        %v676 = vunpack.c.l.b16 %v473
        %v677 = vunpack.c.l.b16 %v474
        %v678 = vunpack.c.l.b16 %v475
        %v679 = vunpack.c.l.b16 %v476
        %v680 = vunpack.c.l.b16 %v477
        %v681 = vunpack.c.l.b16 %v478
        %v682 = vunpack.c.l.b16 %v479
        %v683 = vunpack.c.l.b16 %v480
        %v684 = vunpack.c.l.b16 %v481
        %v685 = vunpack.c.l.b16 %v482
        %v686 = vunpack.c.l.b16 %v483
        %v687 = vunpack.c.l.b16 %v484
        %v688 = vunpack.c.l.b16 %v485
        %v689 = vunpack.c.l.b16 %v486
        %v690 = vunpack.c.l.b16 %v487
        %v691 = vunpack.c.l.b16 %v488
        %v692 = vunpack.c.l.b16 %v489
        %v693 = vunpack.c.l.b16 %v490
        %v694 = vunpack.c.l.b16 %v491
        %v695 = vunpack.c.l.b16 %v492
        %v696 = vunpack.c.l.b16 %v493
        %v697 = vunpack.c.l.b16 %v494
        %v698 = vunpack.c.l.b16 %v495
        %v699 = vunpack.c.l.b16 %v496
        %v700 = vunpack.c.l.b16 %v497
        %v701 = vunpack.c.l.b16 %v498
        %v702 = vunpack.c.l.b16 %v499
        %v703 = vunpack.c.l.b16 %v500
        %v704 = vunpack.c.l.b16 %v501
        %v705 = vunpack.c.l.b16 %v502
        %v706 = vunpack.c.l.b16 %v503
        %v707 = vunpack.c.l.b16 %v504
        %v708 = vunpack.c.l.b16 %v505
        %v709 = vunpack.c.l.b16 %v506
        %v710 = vunpack.c.l.b16 %v507
        %v711 = vunpack.c.l.b16 %v508
        %v712 = vunpack.c.l.b16 %v509
        %v713 = vunpack.c.l.b16 %v510
        %v714 = vunpack.c.l.b16 %v511
        %v715 = vunpack.c.l.b16 %v512
        %v716 = vunpack.c.l.b16 %v513
        %v717 = vunpack.c.l.b16 %v514
        %v718 = vunpack.c.l.b16 %v515
        %v719 = vunpack.c.l.b16 %v516
        %v720 = vunpack.c.l.b16 %v517
        %v721 = vunpack.c.l.b16 %v518
        %v722 = vunpack.c.l.b16 %v519
        %v723 = vunpack.c.l.b16 %v520
        %v724 = vunpack.c.l.b16 %v521
        %v725 = vunpack.c.l.b16 %v522
        %v726 = vunpack.c.l.b16 %v523
        %v727 = vunpack.c.l.b16 %v524
        %v728 = vunpack.c.l.b16 %v525
        %v729 = vunpack.c.l.b16 %v526
        %v730 = vunpack.c.l.b16 %v527
        %v731 = vunpack.c.l.b16 %v528
        %v732 = vunpack.c.l.b16 %v529
        %v733 = vunpack.c.l.b16 %v530
        %v734 = vunpack.c.l.b16 %v531
        %v735 = vunpack.c.l.b16 %v532
        %v736 = vunpack.c.l.b16 %v533
        %v737 = vunpack.c.l.b16 %v534
        %v738 = vunpack.c.l.b16 %v535
        %v739 = vunpack.c.l.b16 %v536
        %v740 = vunpack.c.l.b16 %v537
        %v741 = vunpack.c.l.b16 %v538
        %v742 = vunpack.c.l.b16 %v539
        %v743 = vunpack.c.l.b16 %v540
        %v744 = vunpack.c.l.b16 %v541
        %v745 = vunpack.c.l.b16 %v542
        %v746 = vunpack.c.l.b16 %v543
        %v747 = vunpack.c.l.b16 %v544
        %v748 = vunpack.c.l.b16 %v545
        %v749 = vunpack.c.l.b16 %v546
        %v750 = vunpack.c.l.b16 %v547
        %v751 = vunpack.c.l.b16 %v548
        %v752 = vunpack.c.l.b16 %v549
        %v753 = vpack.c.b16 %v656, %v655
        %v754 = vpack.c.b16 %v658, %v657
        %v755 = vpack.c.b16 %v660, %v659
        %v756 = vpack.c.b16 %v662, %v661
        %v757 = vpack.c.b16 %v664, %v663
        %v758 = vpack.c.b16 %v666, %v665
        %v759 = vpack.c.b16 %v668, %v667
        %v760 = vpack.c.b16 %v670, %v669
        %v761 = vpack.c.b16 %v672, %v671
        %v762 = vpack.c.b16 %v674, %v673
        %v763 = vpack.c.b16 %v676, %v675
        %v764 = vpack.c.b16 %v678, %v677
        %v765 = vpack.c.b16 %v680, %v679
        %v766 = vpack.c.b16 %v682, %v681
        %v767 = vpack.c.b16 %v684, %v683
        %v768 = vpack.c.b16 %v686, %v685
        %v769 = vpack.c.b16 %v688, %v687
        %v770 = vpack.c.b16 %v690, %v689
        %v771 = vpack.c.b16 %v692, %v691
        %v772 = vpack.c.b16 %v694, %v693
        %v773 = vpack.c.b16 %v696, %v695
        %v774 = vpack.c.b16 %v698, %v697
        %v775 = vpack.c.b16 %v700, %v699
        %v776 = vpack.c.b16 %v702, %v701
        %v777 = vpack.c.b16 %v704, %v703
        %v778 = vpack.c.b16 %v706, %v705
        %v779 = vpack.c.b16 %v708, %v707
        %v780 = vpack.c.b16 %v710, %v709
        %v781 = vpack.c.b16 %v712, %v711
        %v782 = vpack.c.b16 %v714, %v713
        %v783 = vpack.c.b16 %v716, %v715
        %v784 = vpack.c.b16 %v718, %v717
        %v785 = vpack.c.b16 %v720, %v719
        %v786 = vpack.c.b16 %v722, %v721
        %v787 = vpack.c.b16 %v724, %v723
        %v788 = vpack.c.b16 %v726, %v725
        %v789 = vpack.c.b16 %v728, %v727
        %v790 = vpack.c.b16 %v730, %v729
        %v791 = vpack.c.b16 %v732, %v731
        %v792 = vpack.c.b16 %v734, %v733
        %v793 = vpack.c.b16 %v736, %v735
        %v794 = vpack.c.b16 %v738, %v737
        %v795 = vpack.c.b16 %v740, %v739
        %v796 = vpack.c.b16 %v742, %v741
        %v797 = vpack.c.b16 %v744, %v743
        %v798 = vpack.c.b16 %v746, %v745
        %v799 = vpack.c.b16 %v748, %v747
        %v800 = vpack.c.b16 %v750, %v749
        %v801 = vpack.c.b16 %v752, %v751
        %vm851 = vcmask 130048
        %v853 = vsel %vm851, %v402, 0
        %v856 = vsel %vm851, %v409, 0
        %v859 = vsel %vm851, %v416, 0
        %v862 = vsel %vm851, %v423, 0
        %v865 = vsel %vm851, %v430, 0
        %v868 = vsel %vm851, %v437, 0
        %v871 = vsel %vm851, %v444, 0
        %v874 = vsel %vm851, %v451, 0
        %876 = vmatprep.subr.bf16.mxu0 0
        %877 = vmatpush1.bf16.msra.mxu0 %v753
        %878 = vmatprep.subr.bf16.mxu0 0
        %879 = vmatpush1.bf16.msra.mxu0 %v754
        %880 = vmatprep.subr.bf16.mxu0 0
        %881 = vmatpush1.bf16.msra.mxu0 %v755
        %882 = vmatprep.subr.bf16.mxu0 0
        %883 = vmatpush1.bf16.msra.mxu0 %v756
        %884 = vmatprep.subr.bf16.mxu0 0
        %885 = vmatpush1.bf16.msra.mxu0 %v757
        %886 = vmatprep.subr.bf16.mxu0 0
        %887 = vmatpush1.bf16.msra.mxu0 %v758
        %888 = vmatprep.subr.bf16.mxu0 0
        %889 = vmatpush1.bf16.msra.mxu0 %v759
        %890 = vmatprep.subr.bf16.mxu0 0
        %891 = vmatpush1.bf16.msra.mxu0 %v760
        %892 = vmatprep.subr.bf16.mxu0 0
        %893 = vmatpush1.bf16.msra.mxu0 %v761
        %894 = vmatprep.subr.bf16.mxu0 0
        %895 = vmatpush1.bf16.msra.mxu0 %v762
        %896 = vmatprep.subr.bf16.mxu0 0
        %897 = vmatpush1.bf16.msra.mxu0 %v763
        %898 = vmatprep.subr.bf16.mxu0 0
        %899 = vmatpush1.bf16.msra.mxu0 %v764
        %900 = vmatprep.subr.bf16.mxu0 0
        %901 = vmatpush1.bf16.msra.mxu0 %v765
        %902 = vmatprep.subr.bf16.mxu0 0
        %903 = vmatpush1.bf16.msra.mxu0 %v766
        %904 = vmatprep.subr.bf16.mxu0 0
        %905 = vmatpush1.bf16.msra.mxu0 %v767
        %906 = vmatprep.subr.bf16.mxu0 0
        %907 = vmatpush1.bf16.msra.mxu0 %v768
        %908 = vmatprep.mubr.bf16.mxu0 %v397
        %909 = vmatmul.mubr.bf16.gmra.mrb[0].mxu0 %v396
        %v910 = vpop.f32.mrb[0].mxu0
        %v911 = vadd.f32 %v555, %v910
        %v912 = vpop.f32.mrb[0].mxu0
        %v913 = vpop.f32.mrb[0].mxu0
        %v914 = vadd.f32 %v555, %v913
        %v915 = vpop.f32.mrb[0].mxu0
        %916 = vmatprep.mubr.bf16.mxu0 %v404
        %917 = vmatmul.mubr.bf16.gmra.mrb[0].mxu0 %v403
        %v918 = vpop.f32.mrb[0].mxu0
        %v919 = vadd.f32 %v555, %v918
        %v920 = vpop.f32.mrb[0].mxu0
        %v921 = vpop.f32.mrb[0].mxu0
        %v922 = vadd.f32 %v555, %v921
        %v923 = vpop.f32.mrb[0].mxu0
        %924 = vmatprep.mubr.bf16.mxu0 %v411
        %925 = vmatmul.mubr.bf16.gmra.mrb[0].mxu0 %v410
        %v926 = vpop.f32.mrb[0].mxu0
        %v927 = vadd.f32 %v555, %v926
        %v928 = vpop.f32.mrb[0].mxu0
        %v929 = vpop.f32.mrb[0].mxu0
        %v930 = vadd.f32 %v555, %v929
        %v931 = vpop.f32.mrb[0].mxu0
        %932 = vmatprep.mubr.bf16.mxu0 %v418
        %933 = vmatmul.mubr.bf16.gmra.mrb[0].mxu0 %v417
        %v934 = vpop.f32.mrb[0].mxu0
        %v935 = vadd.f32 %v555, %v934
        %v936 = vpop.f32.mrb[0].mxu0
        %v937 = vpop.f32.mrb[0].mxu0
        %v938 = vadd.f32 %v555, %v937
        %v939 = vpop.f32.mrb[0].mxu0
        %940 = vmatprep.mubr.bf16.mxu0 %v425
        %941 = vmatmul.mubr.bf16.gmra.mrb[0].mxu0 %v424
        %v942 = vpop.f32.mrb[0].mxu0
        %v943 = vadd.f32 %v555, %v942
        %v944 = vpop.f32.mrb[0].mxu0
        %v945 = vpop.f32.mrb[0].mxu0
        %v946 = vadd.f32 %v555, %v945
        %v947 = vpop.f32.mrb[0].mxu0
        %948 = vmatprep.mubr.bf16.mxu0 %v432
        %949 = vmatmul.mubr.bf16.gmra.mrb[0].mxu0 %v431
        %v950 = vpop.f32.mrb[0].mxu0
        %v951 = vadd.f32 %v555, %v950
        %v952 = vpop.f32.mrb[0].mxu0
        %v953 = vpop.f32.mrb[0].mxu0
        %v954 = vadd.f32 %v555, %v953
        %v955 = vpop.f32.mrb[0].mxu0
        %956 = vmatprep.mubr.bf16.mxu0 %v439
        %957 = vmatmul.mubr.bf16.gmra.mrb[0].mxu0 %v438
        %v958 = vpop.f32.mrb[0].mxu0
        %v959 = vadd.f32 %v555, %v958
        %v960 = vpop.f32.mrb[0].mxu0
        %v961 = vpop.f32.mrb[0].mxu0
        %v962 = vadd.f32 %v555, %v961
        %v963 = vpop.f32.mrb[0].mxu0
        %964 = vmatprep.mubr.bf16.mxu0 %v446
        %965 = vmatmul.mubr.bf16.gmra.mrb[0].mxu0 %v445
        %v966 = vpop.f32.mrb[0].mxu0
        %v967 = vadd.f32 %v555, %v966
        %v968 = vpop.f32.mrb[0].mxu0
        %v969 = vpop.f32.mrb[0].mxu0
        %v970 = vadd.f32 %v555, %v969
        %v971 = vpop.f32.mrb[0].mxu0
        %972 = vdwg.mxu0
        %973 = vmatprep.subr.bf16.mxu0 0
        %974 = vmatpush1.bf16.msra.mxu0 %v769
        %975 = vmatprep.subr.bf16.mxu0 0
        %976 = vmatpush1.bf16.msra.mxu0 %v770
        %977 = vmatprep.subr.bf16.mxu0 0
        %978 = vmatpush1.bf16.msra.mxu0 %v771
        %979 = vmatprep.subr.bf16.mxu0 0
        %980 = vmatpush1.bf16.msra.mxu0 %v772
        %981 = vmatprep.subr.bf16.mxu0 0
        %982 = vmatpush1.bf16.msra.mxu0 %v773
        %983 = vmatprep.subr.bf16.mxu0 0
        %984 = vmatpush1.bf16.msra.mxu0 %v774
        %985 = vmatprep.subr.bf16.mxu0 0
        %986 = vmatpush1.bf16.msra.mxu0 %v775
        %987 = vmatprep.subr.bf16.mxu0 0
        %988 = vmatpush1.bf16.msra.mxu0 %v776
        %989 = vmatprep.subr.bf16.mxu0 0
        %990 = vmatpush1.bf16.msra.mxu0 %v777
        %991 = vmatprep.subr.bf16.mxu0 0
        %992 = vmatpush1.bf16.msra.mxu0 %v778
        %993 = vmatprep.subr.bf16.mxu0 0
        %994 = vmatpush1.bf16.msra.mxu0 %v779
        %995 = vmatprep.subr.bf16.mxu0 0
        %996 = vmatpush1.bf16.msra.mxu0 %v780
        %997 = vmatprep.subr.bf16.mxu0 0
        %998 = vmatpush1.bf16.msra.mxu0 %v781
        %999 = vmatprep.subr.bf16.mxu0 0
        %1000 = vmatpush1.bf16.msra.mxu0 %v782
        %1001 = vmatprep.subr.bf16.mxu0 0
        %1002 = vmatpush1.bf16.msra.mxu0 %v783
        %1003 = vmatprep.subr.bf16.mxu0 0
        %1004 = vmatpush1.bf16.msra.mxu0 %v784
        %1005 = vmatprep.mubr.bf16.mxu0 %v399
        %1006 = vmatmul.mubr.bf16.gmra.mrb[0].mxu0 %v398
        %v1007 = vpop.f32.mrb[0].mxu0
        %v1008 = vadd.f32 %v911, %v1007
        %v1009 = vpop.f32.mrb[0].mxu0
        %v1010 = vpop.f32.mrb[0].mxu0
        %v1011 = vadd.f32 %v914, %v1010
        %v1012 = vpop.f32.mrb[0].mxu0
        %1013 = vmatprep.mubr.bf16.mxu0 %v406
        %1014 = vmatmul.mubr.bf16.gmra.mrb[0].mxu0 %v405
        %v1015 = vpop.f32.mrb[0].mxu0
        %v1016 = vadd.f32 %v919, %v1015
        %v1017 = vpop.f32.mrb[0].mxu0
        %v1018 = vpop.f32.mrb[0].mxu0
        %v1019 = vadd.f32 %v922, %v1018
        %v1020 = vpop.f32.mrb[0].mxu0
        %1021 = vmatprep.mubr.bf16.mxu0 %v413
        %1022 = vmatmul.mubr.bf16.gmra.mrb[0].mxu0 %v412
        %v1023 = vpop.f32.mrb[0].mxu0
        %v1024 = vadd.f32 %v927, %v1023
        %v1025 = vpop.f32.mrb[0].mxu0
        %v1026 = vpop.f32.mrb[0].mxu0
        %v1027 = vadd.f32 %v930, %v1026
        %v1028 = vpop.f32.mrb[0].mxu0
        %1029 = vmatprep.mubr.bf16.mxu0 %v420
        %1030 = vmatmul.mubr.bf16.gmra.mrb[0].mxu0 %v419
        %v1031 = vpop.f32.mrb[0].mxu0
        %v1032 = vadd.f32 %v935, %v1031
        %v1033 = vpop.f32.mrb[0].mxu0
        %v1034 = vpop.f32.mrb[0].mxu0
        %v1035 = vadd.f32 %v938, %v1034
        %v1036 = vpop.f32.mrb[0].mxu0
        %1037 = vmatprep.mubr.bf16.mxu0 %v427
        %1038 = vmatmul.mubr.bf16.gmra.mrb[0].mxu0 %v426
        %v1039 = vpop.f32.mrb[0].mxu0
        %v1040 = vadd.f32 %v943, %v1039
        %v1041 = vpop.f32.mrb[0].mxu0
        %v1042 = vpop.f32.mrb[0].mxu0
        %v1043 = vadd.f32 %v946, %v1042
        %v1044 = vpop.f32.mrb[0].mxu0
        %1045 = vmatprep.mubr.bf16.mxu0 %v434
        %1046 = vmatmul.mubr.bf16.gmra.mrb[0].mxu0 %v433
        %v1047 = vpop.f32.mrb[0].mxu0
        %v1048 = vadd.f32 %v951, %v1047
        %v1049 = vpop.f32.mrb[0].mxu0
        %v1050 = vpop.f32.mrb[0].mxu0
        %v1051 = vadd.f32 %v954, %v1050
        %v1052 = vpop.f32.mrb[0].mxu0
        %1053 = vmatprep.mubr.bf16.mxu0 %v441
        %1054 = vmatmul.mubr.bf16.gmra.mrb[0].mxu0 %v440
        %v1055 = vpop.f32.mrb[0].mxu0
        %v1056 = vadd.f32 %v959, %v1055
        %v1057 = vpop.f32.mrb[0].mxu0
        %v1058 = vpop.f32.mrb[0].mxu0
        %v1059 = vadd.f32 %v962, %v1058
        %v1060 = vpop.f32.mrb[0].mxu0
        %1061 = vmatprep.mubr.bf16.mxu0 %v448
        %1062 = vmatmul.mubr.bf16.gmra.mrb[0].mxu0 %v447
        %v1063 = vpop.f32.mrb[0].mxu0
        %v1064 = vadd.f32 %v967, %v1063
        %v1065 = vpop.f32.mrb[0].mxu0
        %v1066 = vpop.f32.mrb[0].mxu0
        %v1067 = vadd.f32 %v970, %v1066
        %v1068 = vpop.f32.mrb[0].mxu0
        %1069 = vdwg.mxu0
        %1070 = vmatprep.subr.bf16.mxu0 0
        %1071 = vmatpush1.bf16.msra.mxu0 %v785
        %1072 = vmatprep.subr.bf16.mxu0 0
        %1073 = vmatpush1.bf16.msra.mxu0 %v786
        %1074 = vmatprep.subr.bf16.mxu0 0
        %1075 = vmatpush1.bf16.msra.mxu0 %v787
        %1076 = vmatprep.subr.bf16.mxu0 0
        %1077 = vmatpush1.bf16.msra.mxu0 %v788
        %1078 = vmatprep.subr.bf16.mxu0 0
        %1079 = vmatpush1.bf16.msra.mxu0 %v789
        %1080 = vmatprep.subr.bf16.mxu0 0
        %1081 = vmatpush1.bf16.msra.mxu0 %v790
        %1082 = vmatprep.subr.bf16.mxu0 0
        %1083 = vmatpush1.bf16.msra.mxu0 %v791
        %1084 = vmatprep.subr.bf16.mxu0 0
        %1085 = vmatpush1.bf16.msra.mxu0 %v792
        %1086 = vmatprep.subr.bf16.mxu0 0
        %1087 = vmatpush1.bf16.msra.mxu0 %v793
        %1088 = vmatprep.subr.bf16.mxu0 0
        %1089 = vmatpush1.bf16.msra.mxu0 %v794
        %1090 = vmatprep.subr.bf16.mxu0 0
        %1091 = vmatpush1.bf16.msra.mxu0 %v795
        %1092 = vmatprep.subr.bf16.mxu0 0
        %1093 = vmatpush1.bf16.msra.mxu0 %v796
        %1094 = vmatprep.subr.bf16.mxu0 0
        %1095 = vmatpush1.bf16.msra.mxu0 %v797
        %1096 = vmatprep.subr.bf16.mxu0 0
        %1097 = vmatpush1.bf16.msra.mxu0 %v798
        %1098 = vmatprep.subr.bf16.mxu0 0
        %1099 = vmatpush1.bf16.msra.mxu0 %v799
        %1100 = vmatprep.subr.bf16.mxu0 0
        %1101 = vmatpush1.bf16.msra.mxu0 %v800
        %1102 = vmatprep.mubr.bf16.mxu0 %v401
        %1103 = vmatmul.mubr.bf16.gmra.mrb[0].mxu0 %v400
        %v1104 = vpop.f32.mrb[0].mxu0
        %v1105 = vadd.f32 %v1008, %v1104
        %v1106 = vpop.f32.mrb[0].mxu0
        %v1107 = vpop.f32.mrb[0].mxu0
        %v1108 = vadd.f32 %v1011, %v1107
        %v1109 = vpop.f32.mrb[0].mxu0
        %1110 = vmatprep.mubr.bf16.mxu0 %v408
        %1111 = vmatmul.mubr.bf16.gmra.mrb[0].mxu0 %v407
        %v1112 = vpop.f32.mrb[0].mxu0
        %v1113 = vadd.f32 %v1016, %v1112
        %v1114 = vpop.f32.mrb[0].mxu0
        %v1115 = vpop.f32.mrb[0].mxu0
        %v1116 = vadd.f32 %v1019, %v1115
        %v1117 = vpop.f32.mrb[0].mxu0
        %1118 = vmatprep.mubr.bf16.mxu0 %v415
        %1119 = vmatmul.mubr.bf16.gmra.mrb[0].mxu0 %v414
        %v1120 = vpop.f32.mrb[0].mxu0
        %v1121 = vadd.f32 %v1024, %v1120
        %v1122 = vpop.f32.mrb[0].mxu0
        %v1123 = vpop.f32.mrb[0].mxu0
        %v1124 = vadd.f32 %v1027, %v1123
        %v1125 = vpop.f32.mrb[0].mxu0
        %1126 = vmatprep.mubr.bf16.mxu0 %v422
        %1127 = vmatmul.mubr.bf16.gmra.mrb[0].mxu0 %v421
        %v1128 = vpop.f32.mrb[0].mxu0
        %v1129 = vadd.f32 %v1032, %v1128
        %v1130 = vpop.f32.mrb[0].mxu0
        %v1131 = vpop.f32.mrb[0].mxu0
        %v1132 = vadd.f32 %v1035, %v1131
        %v1133 = vpop.f32.mrb[0].mxu0
        %1134 = vmatprep.mubr.bf16.mxu0 %v429
        %1135 = vmatmul.mubr.bf16.gmra.mrb[0].mxu0 %v428
        %v1136 = vpop.f32.mrb[0].mxu0
        %v1137 = vadd.f32 %v1040, %v1136
        %v1138 = vpop.f32.mrb[0].mxu0
        %v1139 = vpop.f32.mrb[0].mxu0
        %v1140 = vadd.f32 %v1043, %v1139
        %v1141 = vpop.f32.mrb[0].mxu0
        %1142 = vmatprep.mubr.bf16.mxu0 %v436
        %1143 = vmatmul.mubr.bf16.gmra.mrb[0].mxu0 %v435
        %v1144 = vpop.f32.mrb[0].mxu0
        %v1145 = vadd.f32 %v1048, %v1144
        %v1146 = vpop.f32.mrb[0].mxu0
        %v1147 = vpop.f32.mrb[0].mxu0
        %v1148 = vadd.f32 %v1051, %v1147
        %v1149 = vpop.f32.mrb[0].mxu0
        %1150 = vmatprep.mubr.bf16.mxu0 %v443
        %1151 = vmatmul.mubr.bf16.gmra.mrb[0].mxu0 %v442
        %v1152 = vpop.f32.mrb[0].mxu0
        %v1153 = vadd.f32 %v1056, %v1152
        %v1154 = vpop.f32.mrb[0].mxu0
        %v1155 = vpop.f32.mrb[0].mxu0
        %v1156 = vadd.f32 %v1059, %v1155
        %v1157 = vpop.f32.mrb[0].mxu0
        %1158 = vmatprep.mubr.bf16.mxu0 %v450
        %1159 = vmatmul.mubr.bf16.gmra.mrb[0].mxu0 %v449
        %v1160 = vpop.f32.mrb[0].mxu0
        %v1161 = vadd.f32 %v1064, %v1160
        %v1162 = vpop.f32.mrb[0].mxu0
        %v1163 = vpop.f32.mrb[0].mxu0
        %v1164 = vadd.f32 %v1067, %v1163
        %v1165 = vpop.f32.mrb[0].mxu0
        %1166 = vdwg.mxu0
        %1167 = vmatprep.subr.bf16.mxu0 0
        %1168 = vmatpush1.bf16.msra.mxu0 %v801
        %1169 = vmatprep.subr.bf16.mxu0 0
        %1170 = vmatpush1.bf16.msra.mxu0 0
        %1171 = vmatprep.subr.bf16.mxu0 0
        %1172 = vmatpush1.bf16.msra.mxu0 0
        %1173 = vmatprep.subr.bf16.mxu0 0
        %1174 = vmatpush1.bf16.msra.mxu0 0
        %1175 = vmatprep.subr.bf16.mxu0 0
        %1176 = vmatpush1.bf16.msra.mxu0 0
        %1177 = vmatprep.subr.bf16.mxu0 0
        %1178 = vmatpush1.bf16.msra.mxu0 0
        %1179 = vmatprep.subr.bf16.mxu0 0
        %1180 = vmatpush1.bf16.msra.mxu0 0
        %1181 = vmatprep.subr.bf16.mxu0 0
        %1182 = vmatpush1.bf16.msra.mxu0 0
        %1183 = vmatprep.subr.bf16.mxu0 0
        %1184 = vmatpush1.bf16.msra.mxu0 0
        %1185 = vmatprep.subr.bf16.mxu0 0
        %1186 = vmatpush1.bf16.msra.mxu0 0
        %1187 = vmatprep.subr.bf16.mxu0 0
        %1188 = vmatpush1.bf16.msra.mxu0 0
        %1189 = vmatprep.subr.bf16.mxu0 0
        %1190 = vmatpush1.bf16.msra.mxu0 0
        %1191 = vmatprep.subr.bf16.mxu0 0
        %1192 = vmatpush1.bf16.msra.mxu0 0
        %1193 = vmatprep.subr.bf16.mxu0 0
        %1194 = vmatpush1.bf16.msra.mxu0 0
        %1195 = vmatprep.subr.bf16.mxu0 0
        %1196 = vmatpush1.bf16.msra.mxu0 0
        %1197 = vmatprep.subr.bf16.mxu0 0
        %1198 = vmatpush1.bf16.msra.mxu0 0
        %1199 = vmatprep.mubr.bf16.mxu0 0
        %1200 = vmatmul.mubr.bf16.gmra.mrb[0].mxu0 %v853
        %v1201 = vpop.f32.mrb[0].mxu0
        %v1202 = vadd.f32 %v1105, %v1201
        %v1203 = vpop.f32.mrb[0].mxu0
        %v1204 = vpop.f32.mrb[0].mxu0
        %v1205 = vadd.f32 %v1108, %v1204
        %v1206 = vpop.f32.mrb[0].mxu0
        %1207 = vmatprep.mubr.bf16.mxu0 0
        %1208 = vmatmul.mubr.bf16.gmra.mrb[0].mxu0 %v856
        %v1209 = vpop.f32.mrb[0].mxu0
        %v1210 = vadd.f32 %v1113, %v1209
        %v1211 = vpop.f32.mrb[0].mxu0
        %v1212 = vpop.f32.mrb[0].mxu0
        %v1213 = vadd.f32 %v1116, %v1212
        %v1214 = vpop.f32.mrb[0].mxu0
        %1215 = vmatprep.mubr.bf16.mxu0 0
        %1216 = vmatmul.mubr.bf16.gmra.mrb[0].mxu0 %v859
        %v1217 = vpop.f32.mrb[0].mxu0
        %v1218 = vadd.f32 %v1121, %v1217
        %v1219 = vpop.f32.mrb[0].mxu0
        %v1220 = vpop.f32.mrb[0].mxu0
        %v1221 = vadd.f32 %v1124, %v1220
        %v1222 = vpop.f32.mrb[0].mxu0
        %1223 = vmatprep.mubr.bf16.mxu0 0
        %1224 = vmatmul.mubr.bf16.gmra.mrb[0].mxu0 %v862
        %v1225 = vpop.f32.mrb[0].mxu0
        %v1226 = vadd.f32 %v1129, %v1225
        %v1227 = vpop.f32.mrb[0].mxu0
        %v1228 = vpop.f32.mrb[0].mxu0
        %v1229 = vadd.f32 %v1132, %v1228
        %v1230 = vpop.f32.mrb[0].mxu0
        %1231 = vmatprep.mubr.bf16.mxu0 0
        %1232 = vmatmul.mubr.bf16.gmra.mrb[0].mxu0 %v865
        %v1233 = vpop.f32.mrb[0].mxu0
        %v1234 = vadd.f32 %v1137, %v1233
        %v1235 = vpop.f32.mrb[0].mxu0
        %v1236 = vpop.f32.mrb[0].mxu0
        %v1237 = vadd.f32 %v1140, %v1236
        %v1238 = vpop.f32.mrb[0].mxu0
        %1239 = vmatprep.mubr.bf16.mxu0 0
        %1240 = vmatmul.mubr.bf16.gmra.mrb[0].mxu0 %v868
        %v1241 = vpop.f32.mrb[0].mxu0
        %v1242 = vadd.f32 %v1145, %v1241
        %v1243 = vpop.f32.mrb[0].mxu0
        %v1244 = vpop.f32.mrb[0].mxu0
        %v1245 = vadd.f32 %v1148, %v1244
        %v1246 = vpop.f32.mrb[0].mxu0
        %1247 = vmatprep.mubr.bf16.mxu0 0
        %1248 = vmatmul.mubr.bf16.gmra.mrb[0].mxu0 %v871
        %v1249 = vpop.f32.mrb[0].mxu0
        %v1250 = vadd.f32 %v1153, %v1249
        %v1251 = vpop.f32.mrb[0].mxu0
        %v1252 = vpop.f32.mrb[0].mxu0
        %v1253 = vadd.f32 %v1156, %v1252
        %v1254 = vpop.f32.mrb[0].mxu0
        %1255 = vmatprep.mubr.bf16.mxu0 0
        %1256 = vmatmul.mubr.bf16.gmra.mrb[0].mxu0 %v874
        %v1257 = vpop.f32.mrb[0].mxu0
        %v1258 = vadd.f32 %v1161, %v1257
        %v1259 = vpop.f32.mrb[0].mxu0
        %v1260 = vpop.f32.mrb[0].mxu0
        %v1261 = vadd.f32 %v1164, %v1260
        %v1262 = vpop.f32.mrb[0].mxu0
        %1263 = vdwg.mxu0
        %v1264 = vmax.f32 %v1202, 0.0
        %v1265 = vmax.f32 %v1205, 0.0
        %v1266 = vmax.f32 %v1210, 0.0
        %v1267 = vmax.f32 %v1213, 0.0
        %v1268 = vmax.f32 %v1218, 0.0
        %v1269 = vmax.f32 %v1221, 0.0
        %v1270 = vmax.f32 %v1226, 0.0
        %v1271 = vmax.f32 %v1229, 0.0
        %v1272 = vmax.f32 %v1234, 0.0
        %v1273 = vmax.f32 %v1237, 0.0
        %v1274 = vmax.f32 %v1242, 0.0
        %v1275 = vmax.f32 %v1245, 0.0
        %v1276 = vmax.f32 %v1250, 0.0
        %v1277 = vmax.f32 %v1253, 0.0
        %v1278 = vmax.f32 %v1258, 0.0
        %v1279 = vmax.f32 %v1261, 0.0
        %v1280 = vpack.c.bf16 %v1265, %v1264
        %v1281 = vpack.c.bf16 %v1267, %v1266
        %v1282 = vpack.c.bf16 %v1269, %v1268
        %v1283 = vpack.c.bf16 %v1271, %v1270
        %v1284 = vpack.c.bf16 %v1273, %v1272
        %v1285 = vpack.c.bf16 %v1275, %v1274
        %v1286 = vpack.c.bf16 %v1277, %v1276
        %v1287 = vpack.c.bf16 %v1279, %v1278
        %v1288 = vld [vmem:[%s3] sm:$0xf]
        %v1289 = vld [vmem:[%s3 + $0x4] sm:$0xf]
        %v1290 = vld [vmem:[%s3 + $0x8] sm:$0xf]
        %v1291 = vld [vmem:[%s3 + $0xc] sm:$0xf]
        %v1292 = vld [vmem:[%s3 + $0x10] sm:$0xf]
        %v1293 = vld [vmem:[%s3 + $0x14] sm:$0xf]
        %v1294 = vld [vmem:[%s3 + $0x18] sm:$0xf]
        %v1295 = vld [vmem:[%s3 + $0x1c] sm:$0xf]
        %v1296 = vld [vmem:[%s3 + $0x20] sm:$0xf]
        %v1297 = vld [vmem:[%s3 + $0x24] sm:$0xf]
        %v1298 = vld [vmem:[%s3 + $0x28] sm:$0xf]
        %v1299 = vld [vmem:[%s3 + $0x2c] sm:$0xf]
        %v1300 = vld [vmem:[%s3 + $0x30] sm:$0xf]
        %v1301 = vld [vmem:[%s3 + $0x34] sm:$0xf]
        %v1302 = vld [vmem:[%s3 + $0x38] sm:$0xf]
        %v1303 = vld [vmem:[%s3 + $0x3c] sm:$0xf]
        %v1304 = vld [vmem:[%s4] sm:$0x1]
        %v1306 = vlaneseq
        %v1307 = vshrl.u32 %v1306, 7
        %v1308 = vsub.s32 0, %v1307
        %v1309 = vrot.slane %v1304, %v1308
        %v1327 = vunpack.c.l.b16 %v1288
        %v1328 = vunpack.c.l.b16 %v1289
        %v1329 = vunpack.c.l.b16 %v1290
        %v1330 = vunpack.c.l.b16 %v1291
        %v1331 = vunpack.c.l.b16 %v1292
        %v1332 = vunpack.c.l.b16 %v1293
        %v1333 = vunpack.c.l.b16 %v1294
        %v1334 = vunpack.c.l.b16 %v1295
        %v1335 = vunpack.c.l.b16 %v1296
        %v1336 = vunpack.c.l.b16 %v1297
        %v1337 = vunpack.c.l.b16 %v1298
        %v1338 = vunpack.c.l.b16 %v1299
        %v1339 = vunpack.c.l.b16 %v1300
        %v1340 = vunpack.c.l.b16 %v1301
        %v1341 = vunpack.c.l.b16 %v1302
        %v1342 = vunpack.c.l.b16 %v1303
        %v1343 = vpack.c.b16 %v1328, %v1327
        %v1344 = vpack.c.b16 %v1330, %v1329
        %v1345 = vpack.c.b16 %v1332, %v1331
        %v1346 = vpack.c.b16 %v1334, %v1333
        %v1347 = vpack.c.b16 %v1336, %v1335
        %v1348 = vpack.c.b16 %v1338, %v1337
        %v1349 = vpack.c.b16 %v1340, %v1339
        %v1350 = vpack.c.b16 %v1342, %v1341
        %1359 = vmatprep.subr.bf16.mxu0 0
        %1360 = vmatpush1.bf16.msra.mxu0 %v1343
        %1361 = vmatprep.subr.bf16.mxu0 0
        %1362 = vmatpush1.bf16.msra.mxu0 %v1344
        %1363 = vmatprep.subr.bf16.mxu0 0
        %1364 = vmatpush1.bf16.msra.mxu0 %v1345
        %1365 = vmatprep.subr.bf16.mxu0 0
        %1366 = vmatpush1.bf16.msra.mxu0 %v1346
        %1367 = vmatprep.subr.bf16.mxu0 0
        %1368 = vmatpush1.bf16.msra.mxu0 %v1347
        %1369 = vmatprep.subr.bf16.mxu0 0
        %1370 = vmatpush1.bf16.msra.mxu0 %v1348
        %1371 = vmatprep.subr.bf16.mxu0 0
        %1372 = vmatpush1.bf16.msra.mxu0 %v1349
        %1373 = vmatprep.subr.bf16.mxu0 0
        %1374 = vmatpush1.bf16.msra.mxu0 %v1350
        %1375 = vmatprep.subr.bf16.mxu0 0
        %1376 = vmatpush1.bf16.msra.mxu0 0
        %1377 = vmatprep.subr.bf16.mxu0 0
        %1378 = vmatpush1.bf16.msra.mxu0 0
        %1379 = vmatprep.subr.bf16.mxu0 0
        %1380 = vmatpush1.bf16.msra.mxu0 0
        %1381 = vmatprep.subr.bf16.mxu0 0
        %1382 = vmatpush1.bf16.msra.mxu0 0
        %1383 = vmatprep.subr.bf16.mxu0 0
        %1384 = vmatpush1.bf16.msra.mxu0 0
        %1385 = vmatprep.subr.bf16.mxu0 0
        %1386 = vmatpush1.bf16.msra.mxu0 0
        %1387 = vmatprep.subr.bf16.mxu0 0
        %1388 = vmatpush1.bf16.msra.mxu0 0
        %1389 = vmatprep.subr.bf16.mxu0 0
        %1390 = vmatpush1.bf16.msra.mxu0 0
        %1391 = vmatprep.mubr.bf16.mxu0 0
        %1392 = vmatmul.mubr.bf16.gmra.mrb[0].mxu0 %v1280
        %v1393 = vpop.f32.mrb[0].mxu0
        %v1394 = vadd.f32 %v1309, %v1393
        %v1395 = vpop.f32.mrb[0].mxu0
        %v1396 = vpop.f32.mrb[0].mxu0
        %v1397 = vadd.f32 %v1309, %v1396
        %v1398 = vpop.f32.mrb[0].mxu0
        %1399 = vmatprep.mubr.bf16.mxu0 0
        %1400 = vmatmul.mubr.bf16.gmra.mrb[0].mxu0 %v1281
        %v1401 = vpop.f32.mrb[0].mxu0
        %v1402 = vadd.f32 %v1309, %v1401
        %v1403 = vpop.f32.mrb[0].mxu0
        %v1404 = vpop.f32.mrb[0].mxu0
        %v1405 = vadd.f32 %v1309, %v1404
        %v1406 = vpop.f32.mrb[0].mxu0
        %1407 = vmatprep.mubr.bf16.mxu0 0
        %1408 = vmatmul.mubr.bf16.gmra.mrb[0].mxu0 %v1282
        %v1409 = vpop.f32.mrb[0].mxu0
        %v1410 = vadd.f32 %v1309, %v1409
        %v1411 = vpop.f32.mrb[0].mxu0
        %v1412 = vpop.f32.mrb[0].mxu0
        %v1413 = vadd.f32 %v1309, %v1412
        %v1414 = vpop.f32.mrb[0].mxu0
        %1415 = vmatprep.mubr.bf16.mxu0 0
        %1416 = vmatmul.mubr.bf16.gmra.mrb[0].mxu0 %v1283
        %v1417 = vpop.f32.mrb[0].mxu0
        %v1418 = vadd.f32 %v1309, %v1417
        %v1419 = vpop.f32.mrb[0].mxu0
        %v1420 = vpop.f32.mrb[0].mxu0
        %v1421 = vadd.f32 %v1309, %v1420
        %v1422 = vpop.f32.mrb[0].mxu0
        %1423 = vmatprep.mubr.bf16.mxu0 0
        %1424 = vmatmul.mubr.bf16.gmra.mrb[0].mxu0 %v1284
        %v1425 = vpop.f32.mrb[0].mxu0
        %v1426 = vadd.f32 %v1309, %v1425
        %v1427 = vpop.f32.mrb[0].mxu0
        %v1428 = vpop.f32.mrb[0].mxu0
        %v1429 = vadd.f32 %v1309, %v1428
        %v1430 = vpop.f32.mrb[0].mxu0
        %1431 = vmatprep.mubr.bf16.mxu0 0
        %1432 = vmatmul.mubr.bf16.gmra.mrb[0].mxu0 %v1285
        %v1433 = vpop.f32.mrb[0].mxu0
        %v1434 = vadd.f32 %v1309, %v1433
        %v1435 = vpop.f32.mrb[0].mxu0
        %v1436 = vpop.f32.mrb[0].mxu0
        %v1437 = vadd.f32 %v1309, %v1436
        %v1438 = vpop.f32.mrb[0].mxu0
        %1439 = vmatprep.mubr.bf16.mxu0 0
        %1440 = vmatmul.mubr.bf16.gmra.mrb[0].mxu0 %v1286
        %v1441 = vpop.f32.mrb[0].mxu0
        %v1442 = vadd.f32 %v1309, %v1441
        %v1443 = vpop.f32.mrb[0].mxu0
        %v1444 = vpop.f32.mrb[0].mxu0
        %v1445 = vadd.f32 %v1309, %v1444
        %v1446 = vpop.f32.mrb[0].mxu0
        %1447 = vmatprep.mubr.bf16.mxu0 0
        %1448 = vmatmul.mubr.bf16.gmra.mrb[0].mxu0 %v1287
        %v1449 = vpop.f32.mrb[0].mxu0
        %v1450 = vadd.f32 %v1309, %v1449
        %v1451 = vpop.f32.mrb[0].mxu0
        %v1452 = vpop.f32.mrb[0].mxu0
        %v1453 = vadd.f32 %v1309, %v1452
        %v1454 = vpop.f32.mrb[0].mxu0
        %1455 = vdwg.mxu0
        %v1456 = vmax.f32 %v1394, 0.0
        %v1457 = vmax.f32 %v1397, 0.0
        %v1458 = vmax.f32 %v1402, 0.0
        %v1459 = vmax.f32 %v1405, 0.0
        %v1460 = vmax.f32 %v1410, 0.0
        %v1461 = vmax.f32 %v1413, 0.0
        %v1462 = vmax.f32 %v1418, 0.0
        %v1463 = vmax.f32 %v1421, 0.0
        %v1464 = vmax.f32 %v1426, 0.0
        %v1465 = vmax.f32 %v1429, 0.0
        %v1466 = vmax.f32 %v1434, 0.0
        %v1467 = vmax.f32 %v1437, 0.0
        %v1468 = vmax.f32 %v1442, 0.0
        %v1469 = vmax.f32 %v1445, 0.0
        %v1470 = vmax.f32 %v1450, 0.0
        %v1471 = vmax.f32 %v1453, 0.0
        %v1472 = vpack.c.bf16 %v1457, %v1456
        %v1473 = vpack.c.bf16 %v1459, %v1458
        %v1474 = vpack.c.bf16 %v1461, %v1460
        %v1475 = vpack.c.bf16 %v1463, %v1462
        %v1476 = vpack.c.bf16 %v1465, %v1464
        %v1477 = vpack.c.bf16 %v1467, %v1466
        %v1478 = vpack.c.bf16 %v1469, %v1468
        %v1479 = vpack.c.bf16 %v1471, %v1470
        %v1480 = vld [vmem:[%s5] sm:$0xf]
        %v1481 = vld [vmem:[%s5 + $0x4] sm:$0xf]
        %v1482 = vld [vmem:[%s5 + $0x8] sm:$0xf]
        %v1483 = vld [vmem:[%s5 + $0xc] sm:$0xf]
        %v1484 = vld [vmem:[%s5 + $0x10] sm:$0xf]
        %v1485 = vld [vmem:[%s5 + $0x14] sm:$0xf]
        %v1486 = vld [vmem:[%s5 + $0x18] sm:$0xf]
        %v1487 = vld [vmem:[%s5 + $0x1c] sm:$0xf]
        %v1488 = vld [vmem:[%s5 + $0x20] sm:$0xf]
        %v1489 = vld [vmem:[%s5 + $0x24] sm:$0xf]
        %v1490 = vld [vmem:[%s5 + $0x28] sm:$0xf]
        %v1491 = vld [vmem:[%s5 + $0x2c] sm:$0xf]
        %v1492 = vld [vmem:[%s5 + $0x30] sm:$0xf]
        %v1493 = vld [vmem:[%s5 + $0x34] sm:$0xf]
        %v1494 = vld [vmem:[%s5 + $0x38] sm:$0xf]
        %v1495 = vld [vmem:[%s5 + $0x3c] sm:$0xf]
        %v1496 = vld [vmem:[%s6] sm:$0x1]
        %v1498 = vlaneseq
        %v1499 = vshrl.u32 %v1498, 7
        %v1500 = vsub.s32 0, %v1499
        %v1501 = vrot.slane %v1496, %v1500
        %v1519 = vunpack.c.l.b16 %v1480
        %v1520 = vunpack.c.l.b16 %v1481
        %v1521 = vunpack.c.l.b16 %v1482
        %v1522 = vunpack.c.l.b16 %v1483
        %v1523 = vunpack.c.l.b16 %v1484
        %v1524 = vunpack.c.l.b16 %v1485
        %v1525 = vunpack.c.l.b16 %v1486
        %v1526 = vunpack.c.l.b16 %v1487
        %v1527 = vunpack.c.l.b16 %v1488
        %v1528 = vunpack.c.l.b16 %v1489
        %v1529 = vunpack.c.l.b16 %v1490
        %v1530 = vunpack.c.l.b16 %v1491
        %v1531 = vunpack.c.l.b16 %v1492
        %v1532 = vunpack.c.l.b16 %v1493
        %v1533 = vunpack.c.l.b16 %v1494
        %v1534 = vunpack.c.l.b16 %v1495
        %v1535 = vpack.c.b16 %v1520, %v1519
        %v1536 = vpack.c.b16 %v1522, %v1521
        %v1537 = vpack.c.b16 %v1524, %v1523
        %v1538 = vpack.c.b16 %v1526, %v1525
        %v1539 = vpack.c.b16 %v1528, %v1527
        %v1540 = vpack.c.b16 %v1530, %v1529
        %v1541 = vpack.c.b16 %v1532, %v1531
        %v1542 = vpack.c.b16 %v1534, %v1533
        %1551 = vmatprep.subr.bf16.mxu0 0
        %1552 = vmatpush1.bf16.msra.mxu0 %v1535
        %1553 = vmatprep.subr.bf16.mxu0 0
        %1554 = vmatpush1.bf16.msra.mxu0 %v1536
        %1555 = vmatprep.subr.bf16.mxu0 0
        %1556 = vmatpush1.bf16.msra.mxu0 %v1537
        %1557 = vmatprep.subr.bf16.mxu0 0
        %1558 = vmatpush1.bf16.msra.mxu0 %v1538
        %1559 = vmatprep.subr.bf16.mxu0 0
        %1560 = vmatpush1.bf16.msra.mxu0 %v1539
        %1561 = vmatprep.subr.bf16.mxu0 0
        %1562 = vmatpush1.bf16.msra.mxu0 %v1540
        %1563 = vmatprep.subr.bf16.mxu0 0
        %1564 = vmatpush1.bf16.msra.mxu0 %v1541
        %1565 = vmatprep.subr.bf16.mxu0 0
        %1566 = vmatpush1.bf16.msra.mxu0 %v1542
        %1567 = vmatprep.subr.bf16.mxu0 0
        %1568 = vmatpush1.bf16.msra.mxu0 0
        %1569 = vmatprep.subr.bf16.mxu0 0
        %1570 = vmatpush1.bf16.msra.mxu0 0
        %1571 = vmatprep.subr.bf16.mxu0 0
        %1572 = vmatpush1.bf16.msra.mxu0 0
        %1573 = vmatprep.subr.bf16.mxu0 0
        %1574 = vmatpush1.bf16.msra.mxu0 0
        %1575 = vmatprep.subr.bf16.mxu0 0
        %1576 = vmatpush1.bf16.msra.mxu0 0
        %1577 = vmatprep.subr.bf16.mxu0 0
        %1578 = vmatpush1.bf16.msra.mxu0 0
        %1579 = vmatprep.subr.bf16.mxu0 0
        %1580 = vmatpush1.bf16.msra.mxu0 0
        %1581 = vmatprep.subr.bf16.mxu0 0
        %1582 = vmatpush1.bf16.msra.mxu0 0
        %1583 = vmatprep.mubr.bf16.mxu0 0
        %1584 = vmatmul.mubr.bf16.gmra.mrb[0].mxu0 %v1472
        %v1585 = vpop.f32.mrb[0].mxu0
        %v1586 = vadd.f32 %v1501, %v1585
        %v1587 = vpop.f32.mrb[0].mxu0
        %v1588 = vpop.f32.mrb[0].mxu0
        %v1589 = vadd.f32 %v1501, %v1588
        %v1590 = vpop.f32.mrb[0].mxu0
        %1591 = vmatprep.mubr.bf16.mxu0 0
        %1592 = vmatmul.mubr.bf16.gmra.mrb[0].mxu0 %v1473
        %v1593 = vpop.f32.mrb[0].mxu0
        %v1594 = vadd.f32 %v1501, %v1593
        %v1595 = vpop.f32.mrb[0].mxu0
        %v1596 = vpop.f32.mrb[0].mxu0
        %v1597 = vadd.f32 %v1501, %v1596
        %v1598 = vpop.f32.mrb[0].mxu0
        %1599 = vmatprep.mubr.bf16.mxu0 0
        %1600 = vmatmul.mubr.bf16.gmra.mrb[0].mxu0 %v1474
        %v1601 = vpop.f32.mrb[0].mxu0
        %v1602 = vadd.f32 %v1501, %v1601
        %v1603 = vpop.f32.mrb[0].mxu0
        %v1604 = vpop.f32.mrb[0].mxu0
        %v1605 = vadd.f32 %v1501, %v1604
        %v1606 = vpop.f32.mrb[0].mxu0
        %1607 = vmatprep.mubr.bf16.mxu0 0
        %1608 = vmatmul.mubr.bf16.gmra.mrb[0].mxu0 %v1475
        %v1609 = vpop.f32.mrb[0].mxu0
        %v1610 = vadd.f32 %v1501, %v1609
        %v1611 = vpop.f32.mrb[0].mxu0
        %v1612 = vpop.f32.mrb[0].mxu0
        %v1613 = vadd.f32 %v1501, %v1612
        %v1614 = vpop.f32.mrb[0].mxu0
        %1615 = vmatprep.mubr.bf16.mxu0 0
        %1616 = vmatmul.mubr.bf16.gmra.mrb[0].mxu0 %v1476
        %v1617 = vpop.f32.mrb[0].mxu0
        %v1618 = vadd.f32 %v1501, %v1617
        %v1619 = vpop.f32.mrb[0].mxu0
        %v1620 = vpop.f32.mrb[0].mxu0
        %v1621 = vadd.f32 %v1501, %v1620
        %v1622 = vpop.f32.mrb[0].mxu0
        %1623 = vmatprep.mubr.bf16.mxu0 0
        %1624 = vmatmul.mubr.bf16.gmra.mrb[0].mxu0 %v1477
        %v1625 = vpop.f32.mrb[0].mxu0
        %v1626 = vadd.f32 %v1501, %v1625
        %v1627 = vpop.f32.mrb[0].mxu0
        %v1628 = vpop.f32.mrb[0].mxu0
        %v1629 = vadd.f32 %v1501, %v1628
        %v1630 = vpop.f32.mrb[0].mxu0
        %1631 = vmatprep.mubr.bf16.mxu0 0
        %1632 = vmatmul.mubr.bf16.gmra.mrb[0].mxu0 %v1478
        %v1633 = vpop.f32.mrb[0].mxu0
        %v1634 = vadd.f32 %v1501, %v1633
        %v1635 = vpop.f32.mrb[0].mxu0
        %v1636 = vpop.f32.mrb[0].mxu0
        %v1637 = vadd.f32 %v1501, %v1636
        %v1638 = vpop.f32.mrb[0].mxu0
        %1639 = vmatprep.mubr.bf16.mxu0 0
        %1640 = vmatmul.mubr.bf16.gmra.mrb[0].mxu0 %v1479
        %v1641 = vpop.f32.mrb[0].mxu0
        %v1642 = vadd.f32 %v1501, %v1641
        %v1643 = vpop.f32.mrb[0].mxu0
        %v1644 = vpop.f32.mrb[0].mxu0
        %v1645 = vadd.f32 %v1501, %v1644
        %v1646 = vpop.f32.mrb[0].mxu0
        %1647 = vdwg.mxu0
        %1648 = vst [vmem:[%s274] sm:$0xff] %v1586
        %1649 = vst [vmem:[%s274 + $0x8] sm:$0xff] %v1589
        %1650 = vst [vmem:[%s274 + $0x10] sm:$0xff] %v1594
        %1651 = vst [vmem:[%s274 + $0x18] sm:$0xff] %v1597
        %1652 = vst [vmem:[%s274 + $0x20] sm:$0xff] %v1602
        %1653 = vst [vmem:[%s274 + $0x28] sm:$0xff] %v1605
        %1654 = vst [vmem:[%s274 + $0x30] sm:$0xff] %v1610
        %1655 = vst [vmem:[%s274 + $0x38] sm:$0xff] %v1613
        %1656 = vst [vmem:[%s274 + $0x40] sm:$0xff] %v1618
        %1657 = vst [vmem:[%s274 + $0x48] sm:$0xff] %v1621
        %1658 = vst [vmem:[%s274 + $0x50] sm:$0xff] %v1626
        %1659 = vst [vmem:[%s274 + $0x58] sm:$0xff] %v1629
        %1660 = vst [vmem:[%s274 + $0x60] sm:$0xff] %v1634
        %1661 = vst [vmem:[%s274 + $0x68] sm:$0xff] %v1637
        %1662 = vst [vmem:[%s274 + $0x70] sm:$0xff] %v1642
        %1663 = vst [vmem:[%s274 + $0x78] sm:$0xff] %v1645
        %s1664 = sand.u32 %s181, 1
        %s1665 = scalar_lea.sflag [#allocation3], %s1664
        %s1666 = sand.u32 %s181, 1
        %s1667 = smul.addr %s1666, 128
        %s1668 = scalar_lea.vmem [#allocation2], %s1667
        // Predicated region
        $region49: #{tpu_custom_call.1} parent=47 // pred_check
          %p1669 = pneg %p191
        $region50: #{tpu_custom_call.1} parent=47 // pred_check_branch
          %1671 = sbr.rel (%p1669) target = $region52
        $region51: #{tpu_custom_call.1} parent=47 // pred_region
          %s1672 = smul.u32 16, %s21
          %s1674 = ssub.s32 2048, 2048
          %1675 = vsyncadd %s1665, %s1674
          %s1676 = smul.addr %s1672, 128
          %s1677 = scalar_lea.hbm %s7, %s1676
          %s1678 = sshll.u32 %s1668, 4
          %s1679 = int_to_ptr.vmem [resolvable:$true] %s1678
          %1684 = dma.vmem_to_hbm [thread:$0]  %s1679, 2048, %s1677, %s1665, 128, 128, 8
        $region52: #{tpu_custom_call.1} parent=47 // pred_fallthru
          _
      $region48: #{tpu_custom_call.1} parent=5 // pred_fallthru
        _
      %p1685 = scmp.le.s32.totalorder 2, %s16
      // Predicated region
      $region53: #{tpu_custom_call.1} parent=5 // pred_check
        %p1686 = pneg %p1685
      $region54: #{tpu_custom_call.1} parent=5 // pred_check_branch
        %1688 = sbr.rel (%p1686) target = $region56
      $region55: #{tpu_custom_call.1} parent=5 // pred_region
        %s1689 = ssub.s32 %s16, 2
        // Predicated region
        $region57: #{tpu_custom_call.1} parent=55 // pred_check
          %p1690 = pneg %p197
        $region58: #{tpu_custom_call.1} parent=55 // pred_check_branch
          %1692 = sbr.rel (%p1690) target = $region60
        $region59: #{tpu_custom_call.1} parent=55 // pred_region
          %s1693 = sand.u32 %s182, 1
          %s1694 = scalar_lea.sflag [#allocation3], %s1693
          %s1695 = sand.u32 %s182, 1
          %s1696 = smul.addr %s1695, 128
          %s1697 = scalar_lea.vmem [#allocation2], %s1696
          %1698 = dma.done %s1694, 2048
        $region60: #{tpu_custom_call.1} parent=55 // pred_fallthru
          _
      $region56: #{tpu_custom_call.1} parent=5 // pred_fallthru
        _
    $region6: #{tpu_custom_call.1} parent=1 // loop_footer
      %s20 = sadd.s32 1, %s16
    $region7: #{tpu_custom_call.1} parent=1 // loop_footer_branch
      %15 = sbr.rel target = $region3
    $region8: #{tpu_custom_call.1} parent=1 // loop_exit
      _
    %1699 = vsyncpa [#allocation3], 1
    %s1700 = scalar_lea.sflag [#allocation3], 1
    %1701 = vsyncpa %s1700, 1

</llo_original>
